<compile_context>
chip_gen: v7x
topology: tpu7x:2x2x1
jax: 0.10.0
libtpu: 0.0.40
codegen_flags: <defaults>
</compile_context>

<pallas_src>
import jax
import jax.numpy as jnp
from jax.experimental import pallas as pl
from jax.experimental.pallas import tpu as pltpu

ADAPTER_SCALE = 0.1     # ResidualAdapter(adapter_scalar=0.1)
MASK_RATIO = 0.25       # only used by mask_aug (not part of forward())
NOISE_LEVEL = 1         # aug() adds one noisy copy
BETA = 5.5              # unused by forward()


def _text_adapter_kernel(x_ref, wd_ref, bd_ref, wu_ref, bu_ref, te_ref, o_ref):
    """Fused per-token hot path: norm -> residual adapter -> norm ->
    text affinity (tanh) -> back-projection -> 0.5*x + 0.5*adapted."""
    x = x_ref[...].astype(jnp.float32)                               # (tm, C)

    # img / img.norm(dim=-1, keepdim=True)
    xn = x * jax.lax.rsqrt(jnp.sum(x * x, axis=-1, keepdims=True))

    # ResidualAdapter (bottleneck): x + scale * up(relu(down(x)))
    # TODO(synk): ResidualAdapter source not provided; assumed Linear->ReLU->Linear bottleneck with residual.
    h = jnp.dot(xn.astype(jnp.bfloat16), wd_ref[...],
                preferred_element_type=jnp.float32) + bd_ref[...]    # (tm, Cb)
    h = jnp.maximum(h, 0.0)
    out = xn + ADAPTER_SCALE * (
        jnp.dot(h.astype(jnp.bfloat16), wu_ref[...],
                preferred_element_type=jnp.float32) + bu_ref[...])   # (tm, C)

    # output / output.norm(dim=-1, keepdim=True)
    out = out * jax.lax.rsqrt(jnp.sum(out * out, axis=-1, keepdims=True))

    te = te_ref[...]                                                 # (T, C) bf16
    # affinity = tanh(F.linear(output, text_embeddings)) -> out @ te.T
    # (transposed-RHS contraction on te's C axis; te is reused below, no
    #  separately materialized transpose.)
    aff = jnp.tanh(jax.lax.dot_general(
        out.astype(jnp.bfloat16), te,
        (((1,), (1,)), ((), ())),
        preferred_element_type=jnp.float32))                         # (tm, T)
    # output = F.linear(affinity, text_embeddings.t()) -> aff @ te
    adapted = jnp.dot(aff.astype(jnp.bfloat16), te,
                      preferred_element_type=jnp.float32)            # (tm, C)

    # forward(): 0.5 * x + 0.5 * adapter_forward(x)   (f32 blend)
    o_ref[...] = (0.5 * x + 0.5 * adapted).astype(o_ref.dtype)


def text_adapter_apply(x_flat, params, *, tm=512):
    """x_flat: (M, C) tokens.  Returns (M, C)."""
    M, C = x_flat.shape
    Cb = params["wd_t"].shape[1]          # bottleneck dim C // 4
    T = params["text_emb"].shape[0]       # 2 * num_classes

    # Row tile: a multiple of 256 (full MXU pass on v6e/v7x), no larger than
    # the problem itself, capped at `tm`.  Pad M up to a tile multiple.
    tm = min(tm, max(256, pl.cdiv(M, 256) * 256))
    m_pad = pl.cdiv(M, tm) * tm
    if m_pad != M:
        # pad with ones so the L2 norm in padded (discarded) rows stays finite
        x_in = jnp.pad(x_flat, ((0, m_pad - M), (0, 0)), constant_values=1.0)
    else:
        x_in = x_flat

    full = lambda i: (0, 0)
    # Grid-invariant weights: constant index_map, single-buffered (no re-DMA,
    # half the resident VMEM vs. the default double buffer).
    wspec = lambda shape: pl.BlockSpec(shape, full, pipeline_mode=pl.Buffered(1))

    kernel = pl.pallas_call(
        _text_adapter_kernel,
        out_shape=jax.ShapeDtypeStruct((m_pad, C), x_flat.dtype),
        grid_spec=pltpu.PrefetchScalarGridSpec(
            num_scalar_prefetch=0,
            grid=(m_pad // tm,),
            in_specs=[
                pl.BlockSpec((tm, C), lambda i: (i, 0)),   # x tile
                wspec((C, Cb)),                            # W_down^T (bf16)
                wspec((1, Cb)),                            # b_down   (f32)
                wspec((Cb, C)),                            # W_up^T   (bf16)
                wspec((1, C)),                             # b_up     (f32)
                wspec((T, C)),                             # text_embeddings (bf16)
            ],
            out_specs=pl.BlockSpec((tm, C), lambda i: (i, 0)),
        ),
        compiler_params=pltpu.CompilerParams(
            dimension_semantics=("parallel",),
            # 32 MiB scoped VMEM is safe on every generation (incl. v7x's
            # 64 MiB physical) and comfortably holds tm=512 f32 tiles + weights.
            vmem_limit_bytes=32 * 1024 * 1024),
    )
    out = kernel(x_in,
                 params["wd_t"], params["bd"],
                 params["wu_t"], params["bu"],
                 params["text_emb"])
    return out[:M] if m_pad != M else out


def aug(x, key):
    """TextAdapter.aug: stack [x, x + noise] along a new leading axis."""
    N, H, W, C = x.shape
    std = 0.05 * (1.1 ** 1)
    noise = jax.random.normal(key, x.shape, dtype=x.dtype) * std
    return jnp.stack([x, x + noise], axis=0).reshape(-1, H, W, C)


def text_adapter_forward(x, params, *, is_test=False, key=None):
    """Full TextAdapter.forward for a 4-D NHWC input."""
    if not is_test:
        x = aug(x, key)
    N, H, W, C = x.shape
    out = text_adapter_apply(x.reshape(N * H * W, C), params)
    return out.reshape(N, H, W, C)


def init_params(key, num_classes, C):
    """Deterministic synthetic parameters matching TextAdapter.__init__ shapes."""
    Cb = C // 4
    k = jax.random.split(key, 5)
    # text_embeddings argument has shape (num_classes, C, 2); __init__ concats
    # [..., 0] and [..., 1] along dim 0 -> (2*num_classes, C).
    te_raw = jax.random.normal(k[0], (num_classes, C, 2), dtype=jnp.float32)
    text_emb = jnp.concatenate([te_raw[..., 0], te_raw[..., 1]], axis=0)  # (T, C)
    # ResidualAdapter linears (stored transposed so the kernel does x @ W).
    wd = jax.random.normal(k[1], (Cb, C), dtype=jnp.float32) * 0.02
    bd = jnp.zeros((1, Cb), dtype=jnp.float32)
    wu = jax.random.normal(k[2], (C, Cb), dtype=jnp.float32) * 0.02
    bu = jnp.zeros((1, C), dtype=jnp.float32)
    return {
        "text_emb": text_emb.astype(jnp.bfloat16),   # matmul operands in bf16
        "wd_t": wd.T.astype(jnp.bfloat16),
        "bd": bd,                                    # biases stay f32
        "wu_t": wu.T.astype(jnp.bfloat16),
        "bu": bu,
    }


if __name__ == "__main__":
    key = jax.random.PRNGKey(0)
    k_param, k_x, k_noise = jax.random.split(key, 3)

    # Lane-dense channel dim (C=128) so the output store uses full vector width.
    N, H, W, C = 2, 8, 8, 128          # x: NHWC feature map, C = text-embedding dim
    num_classes = 8                     # text_embeddings: (8, 128, 2) -> concat (16, 128)

    params = init_params(k_param, num_classes, C)
    x = jax.random.normal(k_x, (N, H, W, C), dtype=jnp.float32)

    out = text_adapter_forward(x, params, is_test=False, key=k_noise)
    out = jax.block_until_ready(out)

    assert out.shape == (2 * N, H, W, C), out.shape   # aug doubles the batch
    assert jnp.all(jnp.isfinite(out))
    print("KERNEL_OK")
</pallas_src>

<mosaic_0001>
module attributes {stable_mosaic.version = 11 : i64} {
  func.func @_text_adapter_kernel(%arg0: i32, %arg1: memref<256x128xf32, #tpu.memory_space<vmem>>, %arg2: memref<128x32xbf16, #tpu.memory_space<vmem>>, %arg3: memref<1x32xf32, #tpu.memory_space<vmem>>, %arg4: memref<32x128xbf16, #tpu.memory_space<vmem>>, %arg5: memref<1x128xf32, #tpu.memory_space<vmem>>, %arg6: memref<16x128xbf16, #tpu.memory_space<vmem>>, %arg7: memref<256x128xf32, #tpu.memory_space<vmem>>) attributes {dimension_semantics = [#tpu.dimension_semantics<parallel>], iteration_bounds = array<i64: 1>, scalar_prefetch = 0 : i64, scratch_operands = 0 : i64, tpu.core_type = #tpu.core_type<tc>, window_params = [{transform_indices = @transform_0, window_bounds = array<i64: 256, 128>}, {pipeline_mode = #tpu.pipeline_mode<synchronous>, transform_indices = @transform_1, window_bounds = array<i64: 128, 32>}, {pipeline_mode = #tpu.pipeline_mode<synchronous>, transform_indices = @transform_2, window_bounds = array<i64: 1, 32>}, {pipeline_mode = #tpu.pipeline_mode<synchronous>, transform_indices = @transform_3, window_bounds = array<i64: 32, 128>}, {pipeline_mode = #tpu.pipeline_mode<synchronous>, transform_indices = @transform_4, window_bounds = array<i64: 1, 128>}, {pipeline_mode = #tpu.pipeline_mode<synchronous>, transform_indices = @transform_5, window_bounds = array<i64: 16, 128>}, {transform_indices = @transform_6, window_bounds = array<i64: 256, 128>}]} {
    %c0 = arith.constant 0 : index
    %c0_0 = arith.constant 0 : index
    %0 = vector.load %arg1[%c0, %c0_0] : memref<256x128xf32, #tpu.memory_space<vmem>>, vector<256x128xf32>
    %1 = arith.mulf %0, %0 : vector<256x128xf32>
    %cst = arith.constant dense<0.000000e+00> : vector<256xf32>
    %2 = vector.multi_reduction <add>, %1, %cst [1] : vector<256x128xf32> to vector<256xf32>
    %3 = vector.shape_cast %2 : vector<256xf32> to vector<256x1xf32>
    %4 = math.rsqrt %3 : vector<256x1xf32>
    %5 = vector.broadcast %4 : vector<256x1xf32> to vector<256x128xf32>
    %6 = arith.mulf %0, %5 : vector<256x128xf32>
    %7 = arith.truncf %6 : vector<256x128xf32> to vector<256x128xbf16>
    %c0_1 = arith.constant 0 : index
    %c0_2 = arith.constant 0 : index
    %8 = vector.load %arg2[%c0_1, %c0_2] : memref<128x32xbf16, #tpu.memory_space<vmem>>, vector<128x32xbf16>
    %cst_3 = arith.constant dense<0.000000e+00> : vector<256x32xf32>
    %9 = tpu.matmul %7, %8, %cst_3 {dimension_numbers = #tpu.dot_dimension_numbers<[1], [0], [0], [1], [0, 0, 1, 1], [], []>} : vector<256x128xbf16>, vector<128x32xbf16>, vector<256x32xf32> -> vector<256x32xf32>
    %c0_4 = arith.constant 0 : index
    %c0_5 = arith.constant 0 : index
    %10 = vector.load %arg3[%c0_4, %c0_5] : memref<1x32xf32, #tpu.memory_space<vmem>>, vector<1x32xf32>
    %11 = vector.broadcast %10 : vector<1x32xf32> to vector<256x32xf32>
    %12 = arith.addf %9, %11 : vector<256x32xf32>
    %cst_6 = arith.constant 0.000000e+00 : f32
    %13 = vector.broadcast %cst_6 : f32 to vector<256x32xf32>
    %14 = arith.maximumf %12, %13 : vector<256x32xf32>
    %15 = arith.truncf %14 : vector<256x32xf32> to vector<256x32xbf16>
    %c0_7 = arith.constant 0 : index
    %c0_8 = arith.constant 0 : index
    %16 = vector.load %arg4[%c0_7, %c0_8] : memref<32x128xbf16, #tpu.memory_space<vmem>>, vector<32x128xbf16>
    %cst_9 = arith.constant dense<0.000000e+00> : vector<256x128xf32>
    %17 = tpu.matmul %15, %16, %cst_9 {dimension_numbers = #tpu.dot_dimension_numbers<[1], [0], [0], [1], [0, 0, 1, 1], [], []>} : vector<256x32xbf16>, vector<32x128xbf16>, vector<256x128xf32> -> vector<256x128xf32>
    %c0_10 = arith.constant 0 : index
    %c0_11 = arith.constant 0 : index
    %18 = vector.load %arg5[%c0_10, %c0_11] : memref<1x128xf32, #tpu.memory_space<vmem>>, vector<1x128xf32>
    %19 = vector.broadcast %18 : vector<1x128xf32> to vector<256x128xf32>
    %20 = arith.addf %17, %19 : vector<256x128xf32>
    %cst_12 = arith.constant 1.000000e-01 : f32
    %21 = vector.broadcast %cst_12 : f32 to vector<256x128xf32>
    %22 = arith.mulf %21, %20 : vector<256x128xf32>
    %23 = arith.addf %6, %22 : vector<256x128xf32>
    %24 = arith.mulf %23, %23 : vector<256x128xf32>
    %cst_13 = arith.constant dense<0.000000e+00> : vector<256xf32>
    %25 = vector.multi_reduction <add>, %24, %cst_13 [1] : vector<256x128xf32> to vector<256xf32>
    %26 = vector.shape_cast %25 : vector<256xf32> to vector<256x1xf32>
    %27 = math.rsqrt %26 : vector<256x1xf32>
    %28 = vector.broadcast %27 : vector<256x1xf32> to vector<256x128xf32>
    %29 = arith.mulf %23, %28 : vector<256x128xf32>
    %c0_14 = arith.constant 0 : index
    %c0_15 = arith.constant 0 : index
    %30 = vector.load %arg6[%c0_14, %c0_15] : memref<16x128xbf16, #tpu.memory_space<vmem>>, vector<16x128xbf16>
    %31 = arith.truncf %29 : vector<256x128xf32> to vector<256x128xbf16>
    %cst_16 = arith.constant dense<0.000000e+00> : vector<256x16xf32>
    %32 = tpu.matmul %31, %30, %cst_16 {dimension_numbers = #tpu.dot_dimension_numbers<[1], [1], [0], [0], [0, 0, 1, 0], [], []>} : vector<256x128xbf16>, vector<16x128xbf16>, vector<256x16xf32> -> vector<256x16xf32>
    %33 = math.tanh %32 : vector<256x16xf32>
    %34 = arith.truncf %33 : vector<256x16xf32> to vector<256x16xbf16>
    %cst_17 = arith.constant dense<0.000000e+00> : vector<256x128xf32>
    %35 = tpu.matmul %34, %30, %cst_17 {dimension_numbers = #tpu.dot_dimension_numbers<[1], [0], [0], [1], [0, 0, 1, 1], [], []>} : vector<256x16xbf16>, vector<16x128xbf16>, vector<256x128xf32> -> vector<256x128xf32>
    %cst_18 = arith.constant 5.000000e-01 : f32
    %36 = vector.broadcast %cst_18 : f32 to vector<256x128xf32>
    %37 = arith.mulf %36, %0 : vector<256x128xf32>
    %cst_19 = arith.constant 5.000000e-01 : f32
    %38 = vector.broadcast %cst_19 : f32 to vector<256x128xf32>
    %39 = arith.mulf %38, %35 : vector<256x128xf32>
    %40 = arith.addf %37, %39 : vector<256x128xf32>
    %c0_20 = arith.constant 0 : index
    %c0_21 = arith.constant 0 : index
    %41 = vector.load %arg7[%c0_20, %c0_21] : memref<256x128xf32, #tpu.memory_space<vmem>>, vector<256x128xf32>
    tpu.vector_store %arg7[%c0_20, %c0_21], %40 {strides = array<i32>} : memref<256x128xf32, #tpu.memory_space<vmem>>, vector<256x128xf32>,
    return
  }
  func.func @transform_0(%arg0: i32) -> (i32, i32) {
    %c0_i32 = arith.constant 0 : i32
    %c0_i32_0 = arith.constant 0 : i32
    return %arg0, %c0_i32 : i32, i32
  }
  func.func @transform_1(%arg0: i32) -> (i32, i32) {
    %c0_i32 = arith.constant 0 : i32
    %c0_i32_0 = arith.constant 0 : i32
    %c0_i32_1 = arith.constant 0 : i32
    return %c0_i32, %c0_i32_0 : i32, i32
  }
  func.func @transform_2(%arg0: i32) -> (i32, i32) {
    %c0_i32 = arith.constant 0 : i32
    %c0_i32_0 = arith.constant 0 : i32
    %c0_i32_1 = arith.constant 0 : i32
    return %c0_i32, %c0_i32_0 : i32, i32
  }
  func.func @transform_3(%arg0: i32) -> (i32, i32) {
    %c0_i32 = arith.constant 0 : i32
    %c0_i32_0 = arith.constant 0 : i32
    %c0_i32_1 = arith.constant 0 : i32
    return %c0_i32, %c0_i32_0 : i32, i32
  }
  func.func @transform_4(%arg0: i32) -> (i32, i32) {
    %c0_i32 = arith.constant 0 : i32
    %c0_i32_0 = arith.constant 0 : i32
    %c0_i32_1 = arith.constant 0 : i32
    return %c0_i32, %c0_i32_0 : i32, i32
  }
  func.func @transform_5(%arg0: i32) -> (i32, i32) {
    %c0_i32 = arith.constant 0 : i32
    %c0_i32_0 = arith.constant 0 : i32
    %c0_i32_1 = arith.constant 0 : i32
    return %c0_i32, %c0_i32_0 : i32, i32
  }
  func.func @transform_6(%arg0: i32) -> (i32, i32) {
    %c0_i32 = arith.constant 0 : i32
    %c0_i32_0 = arith.constant 0 : i32
    return %arg0, %c0_i32 : i32, i32
  }
}

</mosaic_0001>

<llo_original>
// kernel: tpu_custom_call.1
$region0: #{tpu_custom_call.1}
  #allocation0 [shape = 'u32[]', space=smem, size = 0x4, offset = 0x4, fixed_abs, tag = 'smem constant byte address 0x4 - core index']
  #allocation1 [shape = 'u32[144,128]{1,0:T(1,128)}', space=vmem, size = 0x12000, scoped, tag = 'internal scratch']
  %s0 = inlined_call_operand.hbm [shape: f32[256,128], index: 0, kind: input, shape index: {}]
  %s1 = inlined_call_operand.vmem [shape: bf16[128,32], index: 1, kind: input, shape index: {}]
  %s2 = inlined_call_operand.vmem [shape: f32[1,32], index: 2, kind: input, shape index: {}]
  %s3 = inlined_call_operand.vmem [shape: bf16[32,128], index: 3, kind: input, shape index: {}]
  %s4 = inlined_call_operand.vmem [shape: f32[1,128], index: 4, kind: input, shape index: {}]
  %s5 = inlined_call_operand.vmem [shape: bf16[16,128], index: 5, kind: input, shape index: {}]
  %s6 = inlined_call_operand.hbm [shape: f32[256,128], index: 6, kind: output, shape index: {}]
  %s7 = sld [smem:[#allocation0]]
  $region38: #{tpu_custom_call.1} parent=0
    _
  %s9 = ssub.s32 1, %s7
  %s10 = scalar_select 0, %s9, %s7
  $region1: #{tpu_custom_call.1} parent=0
    #allocation2 [shape = 'u8[131072]{0}', space=vmem, size = 0x20000, scoped, tag = 'input window, operand 0, single buffered']
    #allocation3 [shape = 's32[1]{0}', space=sflag, size = 0x4, scoped, tag = 'scoped memory for tpu_custom_call.1']
    #allocation4 [shape = 's32[1]{0}', space=sflag, size = 0x4, scoped, tag = 'scoped memory for tpu_custom_call.1']
    #allocation5 [shape = 'u8[131072]{0}', space=vmem, size = 0x20000, scoped, tag = 'output window, operand 0, single buffered']
    %11 = vsyncpa [#allocation3], 0
    %12 = vsyncpa [#allocation4], 0
    // Predicated region
    $region2: #{tpu_custom_call.1} parent=1 // pred_check
      _
    $region3: #{tpu_custom_call.1} parent=1 // pred_check_branch
      %14 = sbr.rel (0) target = $region5
    $region4: #{tpu_custom_call.1} parent=1 // pred_region
      %s16 = ssub.s32 4096, 4096
      %17 = vsyncadd [#allocation3], %s16
      %s18 = sshll.u32 [#allocation2], 4
      %s19 = int_to_ptr.vmem [resolvable:$true] %s18
      %24 = dma.hbm_to_vmem [thread:$0]  %s0, 4096, %s19, [#allocation3], 128, 128, 8
    $region5: #{tpu_custom_call.1} parent=1 // pred_fallthru
      _
    // Predicated region
    $region6: #{tpu_custom_call.1} parent=1 // pred_check
      _
    $region7: #{tpu_custom_call.1} parent=1 // pred_check_branch
      %26 = sbr.rel (0) target = $region9
    $region8: #{tpu_custom_call.1} parent=1 // pred_region
      _
    $region9: #{tpu_custom_call.1} parent=1 // pred_fallthru
      _
    // Predicated region
    $region10: #{tpu_custom_call.1} parent=1 // pred_check
      _
    $region11: #{tpu_custom_call.1} parent=1 // pred_check_branch
      %28 = sbr.rel (0) target = $region13
    $region12: #{tpu_custom_call.1} parent=1 // pred_region
      _
    $region13: #{tpu_custom_call.1} parent=1 // pred_fallthru
      _
    // Predicated region
    $region14: #{tpu_custom_call.1} parent=1 // pred_check
      _
    $region15: #{tpu_custom_call.1} parent=1 // pred_check_branch
      %30 = sbr.rel (0) target = $region17
    $region16: #{tpu_custom_call.1} parent=1 // pred_region
      _
    $region17: #{tpu_custom_call.1} parent=1 // pred_fallthru
      _
    // Predicated region
    $region18: #{tpu_custom_call.1} parent=1 // pred_check
      _
    $region19: #{tpu_custom_call.1} parent=1 // pred_check_branch
      %32 = sbr.rel (0) target = $region21
    $region20: #{tpu_custom_call.1} parent=1 // pred_region
      _
    $region21: #{tpu_custom_call.1} parent=1 // pred_fallthru
      _
    // Predicated region
    $region22: #{tpu_custom_call.1} parent=1 // pred_check
      _
    $region23: #{tpu_custom_call.1} parent=1 // pred_check_branch
      %34 = sbr.rel (0) target = $region25
    $region24: #{tpu_custom_call.1} parent=1 // pred_region
      _
    $region25: #{tpu_custom_call.1} parent=1 // pred_fallthru
      _
    // Predicated region
    $region26: #{tpu_custom_call.1} parent=1 // pred_check
      _
    $region27: #{tpu_custom_call.1} parent=1 // pred_check_branch
      %36 = sbr.rel (0) target = $region29
    $region28: #{tpu_custom_call.1} parent=1 // pred_region
      %37 = dma.done [#allocation3], 4096
    $region29: #{tpu_custom_call.1} parent=1 // pred_fallthru
      _
    %v39 = vld [vmem:[#allocation2] sm:$0xff]
    %v40 = vld [vmem:[#allocation2 + $0x8] sm:$0xff]
    %v41 = vld [vmem:[#allocation2 + $0x10] sm:$0xff]
    %v42 = vld [vmem:[#allocation2 + $0x18] sm:$0xff]
    %v43 = vld [vmem:[#allocation2 + $0x20] sm:$0xff]
    %v44 = vld [vmem:[#allocation2 + $0x28] sm:$0xff]
    %v45 = vld [vmem:[#allocation2 + $0x30] sm:$0xff]
    %v46 = vld [vmem:[#allocation2 + $0x38] sm:$0xff]
    %v47 = vld [vmem:[#allocation2 + $0x40] sm:$0xff]
    %v48 = vld [vmem:[#allocation2 + $0x48] sm:$0xff]
    %v49 = vld [vmem:[#allocation2 + $0x50] sm:$0xff]
    %v50 = vld [vmem:[#allocation2 + $0x58] sm:$0xff]
    %v51 = vld [vmem:[#allocation2 + $0x60] sm:$0xff]
    %v52 = vld [vmem:[#allocation2 + $0x68] sm:$0xff]
    %v53 = vld [vmem:[#allocation2 + $0x70] sm:$0xff]
    %v54 = vld [vmem:[#allocation2 + $0x78] sm:$0xff]
    %v55 = vld [vmem:[#allocation2 + $0x80] sm:$0xff]
    %v56 = vld [vmem:[#allocation2 + $0x88] sm:$0xff]
    %v57 = vld [vmem:[#allocation2 + $0x90] sm:$0xff]
    %v58 = vld [vmem:[#allocation2 + $0x98] sm:$0xff]
    %v59 = vld [vmem:[#allocation2 + $0xa0] sm:$0xff]
    %v60 = vld [vmem:[#allocation2 + $0xa8] sm:$0xff]
    %v61 = vld [vmem:[#allocation2 + $0xb0] sm:$0xff]
    %v62 = vld [vmem:[#allocation2 + $0xb8] sm:$0xff]
    %v63 = vld [vmem:[#allocation2 + $0xc0] sm:$0xff]
    %v64 = vld [vmem:[#allocation2 + $0xc8] sm:$0xff]
    %v65 = vld [vmem:[#allocation2 + $0xd0] sm:$0xff]
    %v66 = vld [vmem:[#allocation2 + $0xd8] sm:$0xff]
    %v67 = vld [vmem:[#allocation2 + $0xe0] sm:$0xff]
    %v68 = vld [vmem:[#allocation2 + $0xe8] sm:$0xff]
    %v69 = vld [vmem:[#allocation2 + $0xf0] sm:$0xff]
    %v70 = vld [vmem:[#allocation2 + $0xf8] sm:$0xff]
    %v71 = vmul.f32 %v39, %v39
    %v72 = vmul.f32 %v40, %v40
    %v73 = vmul.f32 %v41, %v41
    %v74 = vmul.f32 %v42, %v42
    %v75 = vmul.f32 %v43, %v43
    %v76 = vmul.f32 %v44, %v44
    %v77 = vmul.f32 %v45, %v45
    %v78 = vmul.f32 %v46, %v46
    %v79 = vmul.f32 %v47, %v47
    %v80 = vmul.f32 %v48, %v48
    %v81 = vmul.f32 %v49, %v49
    %v82 = vmul.f32 %v50, %v50
    %v83 = vmul.f32 %v51, %v51
    %v84 = vmul.f32 %v52, %v52
    %v85 = vmul.f32 %v53, %v53
    %v86 = vmul.f32 %v54, %v54
    %v87 = vmul.f32 %v55, %v55
    %v88 = vmul.f32 %v56, %v56
    %v89 = vmul.f32 %v57, %v57
    %v90 = vmul.f32 %v58, %v58
    %v91 = vmul.f32 %v59, %v59
    %v92 = vmul.f32 %v60, %v60
    %v93 = vmul.f32 %v61, %v61
    %v94 = vmul.f32 %v62, %v62
    %v95 = vmul.f32 %v63, %v63
    %v96 = vmul.f32 %v64, %v64
    %v97 = vmul.f32 %v65, %v65
    %v98 = vmul.f32 %v66, %v66
    %v99 = vmul.f32 %v67, %v67
    %v100 = vmul.f32 %v68, %v68
    %v101 = vmul.f32 %v69, %v69
    %v102 = vmul.f32 %v70, %v70
    %103 = vadd.xlane.f32.xlu0 %v71
    %v104 = vpop.xlane.xlu0 %103
    %105 = vadd.xlane.f32.xlu0 %v72
    %v106 = vpop.xlane.xlu0 %105
    %107 = vadd.xlane.f32.xlu0 %v73
    %v108 = vpop.xlane.xlu0 %107
    %109 = vadd.xlane.f32.xlu0 %v74
    %v110 = vpop.xlane.xlu0 %109
    %111 = vadd.xlane.f32.xlu0 %v75
    %v112 = vpop.xlane.xlu0 %111
    %113 = vadd.xlane.f32.xlu0 %v76
    %v114 = vpop.xlane.xlu0 %113
    %115 = vadd.xlane.f32.xlu0 %v77
    %v116 = vpop.xlane.xlu0 %115
    %117 = vadd.xlane.f32.xlu0 %v78
    %v118 = vpop.xlane.xlu0 %117
    %119 = vadd.xlane.f32.xlu0 %v79
    %v120 = vpop.xlane.xlu0 %119
    %121 = vadd.xlane.f32.xlu0 %v80
    %v122 = vpop.xlane.xlu0 %121
    %123 = vadd.xlane.f32.xlu0 %v81
    %v124 = vpop.xlane.xlu0 %123
    %125 = vadd.xlane.f32.xlu0 %v82
    %v126 = vpop.xlane.xlu0 %125
    %127 = vadd.xlane.f32.xlu0 %v83
    %v128 = vpop.xlane.xlu0 %127
    %129 = vadd.xlane.f32.xlu0 %v84
    %v130 = vpop.xlane.xlu0 %129
    %131 = vadd.xlane.f32.xlu0 %v85
    %v132 = vpop.xlane.xlu0 %131
    %133 = vadd.xlane.f32.xlu0 %v86
    %v134 = vpop.xlane.xlu0 %133
    %135 = vadd.xlane.f32.xlu0 %v87
    %v136 = vpop.xlane.xlu0 %135
    %137 = vadd.xlane.f32.xlu0 %v88
    %v138 = vpop.xlane.xlu0 %137
    %139 = vadd.xlane.f32.xlu0 %v89
    %v140 = vpop.xlane.xlu0 %139
    %141 = vadd.xlane.f32.xlu0 %v90
    %v142 = vpop.xlane.xlu0 %141
    %143 = vadd.xlane.f32.xlu0 %v91
    %v144 = vpop.xlane.xlu0 %143
    %145 = vadd.xlane.f32.xlu0 %v92
    %v146 = vpop.xlane.xlu0 %145
    %147 = vadd.xlane.f32.xlu0 %v93
    %v148 = vpop.xlane.xlu0 %147
    %149 = vadd.xlane.f32.xlu0 %v94
    %v150 = vpop.xlane.xlu0 %149
    %151 = vadd.xlane.f32.xlu0 %v95
    %v152 = vpop.xlane.xlu0 %151
    %153 = vadd.xlane.f32.xlu0 %v96
    %v154 = vpop.xlane.xlu0 %153
    %155 = vadd.xlane.f32.xlu0 %v97
    %v156 = vpop.xlane.xlu0 %155
    %157 = vadd.xlane.f32.xlu0 %v98
    %v158 = vpop.xlane.xlu0 %157
    %159 = vadd.xlane.f32.xlu0 %v99
    %v160 = vpop.xlane.xlu0 %159
    %161 = vadd.xlane.f32.xlu0 %v100
    %v162 = vpop.xlane.xlu0 %161
    %163 = vadd.xlane.f32.xlu0 %v101
    %v164 = vpop.xlane.xlu0 %163
    %165 = vadd.xlane.f32.xlu0 %v102
    %v166 = vpop.xlane.xlu0 %165
    %v167 = vrsqrt.pop %v104
    %v168 = vrsqrt.pop %v106
    %v169 = vrsqrt.pop %v108
    %v170 = vrsqrt.pop %v110
    %v171 = vrsqrt.pop %v112
    %v172 = vrsqrt.pop %v114
    %v173 = vrsqrt.pop %v116
    %v174 = vrsqrt.pop %v118
    %v175 = vrsqrt.pop %v120
    %v176 = vrsqrt.pop %v122
    %v177 = vrsqrt.pop %v124
    %v178 = vrsqrt.pop %v126
    %v179 = vrsqrt.pop %v128
    %v180 = vrsqrt.pop %v130
    %v181 = vrsqrt.pop %v132
    %v182 = vrsqrt.pop %v134
    %v183 = vrsqrt.pop %v136
    %v184 = vrsqrt.pop %v138
    %v185 = vrsqrt.pop %v140
    %v186 = vrsqrt.pop %v142
    %v187 = vrsqrt.pop %v144
    %v188 = vrsqrt.pop %v146
    %v189 = vrsqrt.pop %v148
    %v190 = vrsqrt.pop %v150
    %v191 = vrsqrt.pop %v152
    %v192 = vrsqrt.pop %v154
    %v193 = vrsqrt.pop %v156
    %v194 = vrsqrt.pop %v158
    %v195 = vrsqrt.pop %v160
    %v196 = vrsqrt.pop %v162
    %v197 = vrsqrt.pop %v164
    %v198 = vrsqrt.pop %v166
    %v199 = vmul.f32 %v39, %v167
    %v200 = vmul.f32 %v40, %v168
    %v201 = vmul.f32 %v41, %v169
    %v202 = vmul.f32 %v42, %v170
    %v203 = vmul.f32 %v43, %v171
    %v204 = vmul.f32 %v44, %v172
    %v205 = vmul.f32 %v45, %v173
    %v206 = vmul.f32 %v46, %v174
    %v207 = vmul.f32 %v47, %v175
    %v208 = vmul.f32 %v48, %v176
    %v209 = vmul.f32 %v49, %v177
    %v210 = vmul.f32 %v50, %v178
    %v211 = vmul.f32 %v51, %v179
    %v212 = vmul.f32 %v52, %v180
    %v213 = vmul.f32 %v53, %v181
    %v214 = vmul.f32 %v54, %v182
    %v215 = vmul.f32 %v55, %v183
    %v216 = vmul.f32 %v56, %v184
    %v217 = vmul.f32 %v57, %v185
    %v218 = vmul.f32 %v58, %v186
    %v219 = vmul.f32 %v59, %v187
    %v220 = vmul.f32 %v60, %v188
    %v221 = vmul.f32 %v61, %v189
    %v222 = vmul.f32 %v62, %v190
    %v223 = vmul.f32 %v63, %v191
    %v224 = vmul.f32 %v64, %v192
    %v225 = vmul.f32 %v65, %v193
    %v226 = vmul.f32 %v66, %v194
    %v227 = vmul.f32 %v67, %v195
    %v228 = vmul.f32 %v68, %v196
    %v229 = vmul.f32 %v69, %v197
    %v230 = vmul.f32 %v70, %v198
    %v231 = vpack.c.bf16 %v200, %v199
    %v232 = vpack.c.bf16 %v202, %v201
    %v233 = vpack.c.bf16 %v204, %v203
    %v234 = vpack.c.bf16 %v206, %v205
    %v235 = vpack.c.bf16 %v208, %v207
    %v236 = vpack.c.bf16 %v210, %v209
    %v237 = vpack.c.bf16 %v212, %v211
    %v238 = vpack.c.bf16 %v214, %v213
    %v239 = vpack.c.bf16 %v216, %v215
    %v240 = vpack.c.bf16 %v218, %v217
    %v241 = vpack.c.bf16 %v220, %v219
    %v242 = vpack.c.bf16 %v222, %v221
    %v243 = vpack.c.bf16 %v224, %v223
    %v244 = vpack.c.bf16 %v226, %v225
    %v245 = vpack.c.bf16 %v228, %v227
    %v246 = vpack.c.bf16 %v230, %v229
    %v247 = vld [vmem:[%s1] sm:$0xf]
    %v248 = vld [vmem:[%s1 + $0x4] sm:$0xf]
    %v249 = vld [vmem:[%s1 + $0x8] sm:$0xf]
    %v250 = vld [vmem:[%s1 + $0xc] sm:$0xf]
    %v251 = vld [vmem:[%s1 + $0x10] sm:$0xf]
    %v252 = vld [vmem:[%s1 + $0x14] sm:$0xf]
    %v253 = vld [vmem:[%s1 + $0x18] sm:$0xf]
    %v254 = vld [vmem:[%s1 + $0x1c] sm:$0xf]
    %v255 = vld [vmem:[%s1 + $0x20] sm:$0xf]
    %v256 = vld [vmem:[%s1 + $0x24] sm:$0xf]
    %v257 = vld [vmem:[%s1 + $0x28] sm:$0xf]
    %v258 = vld [vmem:[%s1 + $0x2c] sm:$0xf]
    %v259 = vld [vmem:[%s1 + $0x30] sm:$0xf]
    %v260 = vld [vmem:[%s1 + $0x34] sm:$0xf]
    %v261 = vld [vmem:[%s1 + $0x38] sm:$0xf]
    %v262 = vld [vmem:[%s1 + $0x3c] sm:$0xf]
    %v263 = vld [vmem:[%s2] sm:$0x1]
    %v265 = vlaneseq
    %v266 = vshrl.u32 %v265, 7
    %v267 = vsub.s32 0, %v266
    %v268 = vrot.slane %v263, %v267
    %v286 = vunpack.c.l.b16 %v247
    %v287 = vunpack.c.l.b16 %v248
    %v288 = vunpack.c.l.b16 %v249
    %v289 = vunpack.c.l.b16 %v250
    %v290 = vunpack.c.l.b16 %v251
    %v291 = vunpack.c.l.b16 %v252
    %v292 = vunpack.c.l.b16 %v253
    %v293 = vunpack.c.l.b16 %v254
    %v294 = vunpack.c.l.b16 %v255
    %v295 = vunpack.c.l.b16 %v256
    %v296 = vunpack.c.l.b16 %v257
    %v297 = vunpack.c.l.b16 %v258
    %v298 = vunpack.c.l.b16 %v259
    %v299 = vunpack.c.l.b16 %v260
    %v300 = vunpack.c.l.b16 %v261
    %v301 = vunpack.c.l.b16 %v262
    %v302 = vpack.c.b16 %v287, %v286
    %v303 = vpack.c.b16 %v289, %v288
    %v304 = vpack.c.b16 %v291, %v290
    %v305 = vpack.c.b16 %v293, %v292
    %v306 = vpack.c.b16 %v295, %v294
    %v307 = vpack.c.b16 %v297, %v296
    %v308 = vpack.c.b16 %v299, %v298
    %v309 = vpack.c.b16 %v301, %v300
    %318 = vmatprep.subr.bf16.mxu0 0
    %319 = vmatpush1.bf16.msra.mxu0 %v302
    %320 = vmatprep.subr.bf16.mxu0 0
    %321 = vmatpush1.bf16.msra.mxu0 %v303
    %322 = vmatprep.subr.bf16.mxu0 0
    %323 = vmatpush1.bf16.msra.mxu0 %v304
    %324 = vmatprep.subr.bf16.mxu0 0
    %325 = vmatpush1.bf16.msra.mxu0 %v305
    %326 = vmatprep.subr.bf16.mxu0 0
    %327 = vmatpush1.bf16.msra.mxu0 %v306
    %328 = vmatprep.subr.bf16.mxu0 0
    %329 = vmatpush1.bf16.msra.mxu0 %v307
    %330 = vmatprep.subr.bf16.mxu0 0
    %331 = vmatpush1.bf16.msra.mxu0 %v308
    %332 = vmatprep.subr.bf16.mxu0 0
    %333 = vmatpush1.bf16.msra.mxu0 %v309
    %334 = vmatprep.subr.bf16.mxu0 0
    %335 = vmatpush1.bf16.msra.mxu0 0
    %336 = vmatprep.subr.bf16.mxu0 0
    %337 = vmatpush1.bf16.msra.mxu0 0
    %338 = vmatprep.subr.bf16.mxu0 0
    %339 = vmatpush1.bf16.msra.mxu0 0
    %340 = vmatprep.subr.bf16.mxu0 0
    %341 = vmatpush1.bf16.msra.mxu0 0
    %342 = vmatprep.subr.bf16.mxu0 0
    %343 = vmatpush1.bf16.msra.mxu0 0
    %344 = vmatprep.subr.bf16.mxu0 0
    %345 = vmatpush1.bf16.msra.mxu0 0
    %346 = vmatprep.subr.bf16.mxu0 0
    %347 = vmatpush1.bf16.msra.mxu0 0
    %348 = vmatprep.subr.bf16.mxu0 0
    %349 = vmatpush1.bf16.msra.mxu0 0
    %350 = vmatprep.mubr.bf16.mxu0 0
    %351 = vmatmul.mubr.bf16.gmra.mrb[0].mxu0 %v231
    %v352 = vpop.f32.mrb[0].mxu0
    %v353 = vadd.f32 %v268, %v352
    %v354 = vpop.f32.mrb[0].mxu0
    %v355 = vpop.f32.mrb[0].mxu0
    %v356 = vadd.f32 %v268, %v355
    %v357 = vpop.f32.mrb[0].mxu0
    %358 = vmatprep.mubr.bf16.mxu0 0
    %359 = vmatmul.mubr.bf16.gmra.mrb[0].mxu0 %v232
    %v360 = vpop.f32.mrb[0].mxu0
    %v361 = vadd.f32 %v268, %v360
    %v362 = vpop.f32.mrb[0].mxu0
    %v363 = vpop.f32.mrb[0].mxu0
    %v364 = vadd.f32 %v268, %v363
    %v365 = vpop.f32.mrb[0].mxu0
    %366 = vmatprep.mubr.bf16.mxu0 0
    %367 = vmatmul.mubr.bf16.gmra.mrb[0].mxu0 %v233
    %v368 = vpop.f32.mrb[0].mxu0
    %v369 = vadd.f32 %v268, %v368
    %v370 = vpop.f32.mrb[0].mxu0
    %v371 = vpop.f32.mrb[0].mxu0
    %v372 = vadd.f32 %v268, %v371
    %v373 = vpop.f32.mrb[0].mxu0
    %374 = vmatprep.mubr.bf16.mxu0 0
    %375 = vmatmul.mubr.bf16.gmra.mrb[0].mxu0 %v234
    %v376 = vpop.f32.mrb[0].mxu0
    %v377 = vadd.f32 %v268, %v376
    %v378 = vpop.f32.mrb[0].mxu0
    %v379 = vpop.f32.mrb[0].mxu0
    %v380 = vadd.f32 %v268, %v379
    %v381 = vpop.f32.mrb[0].mxu0
    %382 = vmatprep.mubr.bf16.mxu0 0
    %383 = vmatmul.mubr.bf16.gmra.mrb[0].mxu0 %v235
    %v384 = vpop.f32.mrb[0].mxu0
    %v385 = vadd.f32 %v268, %v384
    %v386 = vpop.f32.mrb[0].mxu0
    %v387 = vpop.f32.mrb[0].mxu0
    %v388 = vadd.f32 %v268, %v387
    %v389 = vpop.f32.mrb[0].mxu0
    %390 = vmatprep.mubr.bf16.mxu0 0
    %391 = vmatmul.mubr.bf16.gmra.mrb[0].mxu0 %v236
    %v392 = vpop.f32.mrb[0].mxu0
    %v393 = vadd.f32 %v268, %v392
    %v394 = vpop.f32.mrb[0].mxu0
    %v395 = vpop.f32.mrb[0].mxu0
    %v396 = vadd.f32 %v268, %v395
    %v397 = vpop.f32.mrb[0].mxu0
    %398 = vmatprep.mubr.bf16.mxu0 0
    %399 = vmatmul.mubr.bf16.gmra.mrb[0].mxu0 %v237
    %v400 = vpop.f32.mrb[0].mxu0
    %v401 = vadd.f32 %v268, %v400
    %v402 = vpop.f32.mrb[0].mxu0
    %v403 = vpop.f32.mrb[0].mxu0
    %v404 = vadd.f32 %v268, %v403
    %v405 = vpop.f32.mrb[0].mxu0
    %406 = vmatprep.mubr.bf16.mxu0 0
    %407 = vmatmul.mubr.bf16.gmra.mrb[0].mxu0 %v238
    %v408 = vpop.f32.mrb[0].mxu0
    %v409 = vadd.f32 %v268, %v408
    %v410 = vpop.f32.mrb[0].mxu0
    %v411 = vpop.f32.mrb[0].mxu0
    %v412 = vadd.f32 %v268, %v411
    %v413 = vpop.f32.mrb[0].mxu0
    %414 = vmatprep.mubr.bf16.mxu0 0
    %415 = vmatmul.mubr.bf16.gmra.mrb[0].mxu0 %v239
    %v416 = vpop.f32.mrb[0].mxu0
    %v417 = vadd.f32 %v268, %v416
    %v418 = vpop.f32.mrb[0].mxu0
    %v419 = vpop.f32.mrb[0].mxu0
    %v420 = vadd.f32 %v268, %v419
    %v421 = vpop.f32.mrb[0].mxu0
    %422 = vmatprep.mubr.bf16.mxu0 0
    %423 = vmatmul.mubr.bf16.gmra.mrb[0].mxu0 %v240
    %v424 = vpop.f32.mrb[0].mxu0
    %v425 = vadd.f32 %v268, %v424
    %v426 = vpop.f32.mrb[0].mxu0
    %v427 = vpop.f32.mrb[0].mxu0
    %v428 = vadd.f32 %v268, %v427
    %v429 = vpop.f32.mrb[0].mxu0
    %430 = vmatprep.mubr.bf16.mxu0 0
    %431 = vmatmul.mubr.bf16.gmra.mrb[0].mxu0 %v241
    %v432 = vpop.f32.mrb[0].mxu0
    %v433 = vadd.f32 %v268, %v432
    %v434 = vpop.f32.mrb[0].mxu0
    %v435 = vpop.f32.mrb[0].mxu0
    %v436 = vadd.f32 %v268, %v435
    %v437 = vpop.f32.mrb[0].mxu0
    %438 = vmatprep.mubr.bf16.mxu0 0
    %439 = vmatmul.mubr.bf16.gmra.mrb[0].mxu0 %v242
    %v440 = vpop.f32.mrb[0].mxu0
    %v441 = vadd.f32 %v268, %v440
    %v442 = vpop.f32.mrb[0].mxu0
    %v443 = vpop.f32.mrb[0].mxu0
    %v444 = vadd.f32 %v268, %v443
    %v445 = vpop.f32.mrb[0].mxu0
    %446 = vmatprep.mubr.bf16.mxu0 0
    %447 = vmatmul.mubr.bf16.gmra.mrb[0].mxu0 %v243
    %v448 = vpop.f32.mrb[0].mxu0
    %v449 = vadd.f32 %v268, %v448
    %v450 = vpop.f32.mrb[0].mxu0
    %v451 = vpop.f32.mrb[0].mxu0
    %v452 = vadd.f32 %v268, %v451
    %v453 = vpop.f32.mrb[0].mxu0
    %454 = vmatprep.mubr.bf16.mxu0 0
    %455 = vmatmul.mubr.bf16.gmra.mrb[0].mxu0 %v244
    %v456 = vpop.f32.mrb[0].mxu0
    %v457 = vadd.f32 %v268, %v456
    %v458 = vpop.f32.mrb[0].mxu0
    %v459 = vpop.f32.mrb[0].mxu0
    %v460 = vadd.f32 %v268, %v459
    %v461 = vpop.f32.mrb[0].mxu0
    %462 = vmatprep.mubr.bf16.mxu0 0
    %463 = vmatmul.mubr.bf16.gmra.mrb[0].mxu0 %v245
    %v464 = vpop.f32.mrb[0].mxu0
    %v465 = vadd.f32 %v268, %v464
    %v466 = vpop.f32.mrb[0].mxu0
    %v467 = vpop.f32.mrb[0].mxu0
    %v468 = vadd.f32 %v268, %v467
    %v469 = vpop.f32.mrb[0].mxu0
    %470 = vmatprep.mubr.bf16.mxu0 0
    %471 = vmatmul.mubr.bf16.gmra.mrb[0].mxu0 %v246
    %v472 = vpop.f32.mrb[0].mxu0
    %v473 = vadd.f32 %v268, %v472
    %v474 = vpop.f32.mrb[0].mxu0
    %v475 = vpop.f32.mrb[0].mxu0
    %v476 = vadd.f32 %v268, %v475
    %v477 = vpop.f32.mrb[0].mxu0
    %478 = vdwg.mxu0
    %v479 = vmax.f32 %v353, 0.0
    %v480 = vmax.f32 %v356, 0.0
    %v481 = vmax.f32 %v361, 0.0
    %v482 = vmax.f32 %v364, 0.0
    %v483 = vmax.f32 %v369, 0.0
    %v484 = vmax.f32 %v372, 0.0
    %v485 = vmax.f32 %v377, 0.0
    %v486 = vmax.f32 %v380, 0.0
    %v487 = vmax.f32 %v385, 0.0
    %v488 = vmax.f32 %v388, 0.0
    %v489 = vmax.f32 %v393, 0.0
    %v490 = vmax.f32 %v396, 0.0
    %v491 = vmax.f32 %v401, 0.0
    %v492 = vmax.f32 %v404, 0.0
    %v493 = vmax.f32 %v409, 0.0
    %v494 = vmax.f32 %v412, 0.0
    %v495 = vmax.f32 %v417, 0.0
    %v496 = vmax.f32 %v420, 0.0
    %v497 = vmax.f32 %v425, 0.0
    %v498 = vmax.f32 %v428, 0.0
    %v499 = vmax.f32 %v433, 0.0
    %v500 = vmax.f32 %v436, 0.0
    %v501 = vmax.f32 %v441, 0.0
    %v502 = vmax.f32 %v444, 0.0
    %v503 = vmax.f32 %v449, 0.0
    %v504 = vmax.f32 %v452, 0.0
    %v505 = vmax.f32 %v457, 0.0
    %v506 = vmax.f32 %v460, 0.0
    %v507 = vmax.f32 %v465, 0.0
    %v508 = vmax.f32 %v468, 0.0
    %v509 = vmax.f32 %v473, 0.0
    %v510 = vmax.f32 %v476, 0.0
    %v511 = vpack.c.bf16 %v480, %v479
    %v512 = vpack.c.bf16 %v482, %v481
    %v513 = vpack.c.bf16 %v484, %v483
    %v514 = vpack.c.bf16 %v486, %v485
    %v515 = vpack.c.bf16 %v488, %v487
    %v516 = vpack.c.bf16 %v490, %v489
    %v517 = vpack.c.bf16 %v492, %v491
    %v518 = vpack.c.bf16 %v494, %v493
    %v519 = vpack.c.bf16 %v496, %v495
    %v520 = vpack.c.bf16 %v498, %v497
    %v521 = vpack.c.bf16 %v500, %v499
    %v522 = vpack.c.bf16 %v502, %v501
    %v523 = vpack.c.bf16 %v504, %v503
    %v524 = vpack.c.bf16 %v506, %v505
    %v525 = vpack.c.bf16 %v508, %v507
    %v526 = vpack.c.bf16 %v510, %v509
    %v527 = vld [vmem:[%s3] sm:$0xf]
    %v528 = vld [vmem:[%s3 + $0x4] sm:$0xf]
    %v529 = vld [vmem:[%s3 + $0x8] sm:$0xf]
    %v530 = vld [vmem:[%s3 + $0xc] sm:$0xf]
    %v531 = vld [vmem:[%s4] sm:$0x1]
    %v533 = vlaneseq
    %v534 = vshrl.u32 %v533, 7
    %v535 = vsub.s32 0, %v534
    %v536 = vrot.slane %v531, %v535
    %v542 = vunpack.c.l.b16 %v527
    %v543 = vunpack.c.l.b16 %v528
    %v544 = vunpack.c.l.b16 %v529
    %v545 = vunpack.c.l.b16 %v530
    %v546 = vpack.c.b16 %v543, %v542
    %v547 = vpack.c.b16 %v545, %v544
    %vm550 = vcmask 261120
    %v552 = vsel %vm550, %v511, 0
    %v555 = vsel %vm550, %v512, 0
    %v558 = vsel %vm550, %v513, 0
    %v561 = vsel %vm550, %v514, 0
    %v564 = vsel %vm550, %v515, 0
    %v567 = vsel %vm550, %v516, 0
    %v570 = vsel %vm550, %v517, 0
    %v573 = vsel %vm550, %v518, 0
    %v576 = vsel %vm550, %v519, 0
    %v579 = vsel %vm550, %v520, 0
    %v582 = vsel %vm550, %v521, 0
    %v585 = vsel %vm550, %v522, 0
    %v588 = vsel %vm550, %v523, 0
    %v591 = vsel %vm550, %v524, 0
    %v594 = vsel %vm550, %v525, 0
    %v597 = vsel %vm550, %v526, 0
    %599 = vmatprep.subr.bf16.mxu0 0
    %600 = vmatpush1.bf16.msra.mxu0 %v546
    %601 = vmatprep.subr.bf16.mxu0 0
    %602 = vmatpush1.bf16.msra.mxu0 %v547
    %603 = vmatprep.subr.bf16.mxu0 0
    %604 = vmatpush1.bf16.msra.mxu0 0
    %605 = vmatprep.subr.bf16.mxu0 0
    %606 = vmatpush1.bf16.msra.mxu0 0
    %607 = vmatprep.subr.bf16.mxu0 0
    %608 = vmatpush1.bf16.msra.mxu0 0
    %609 = vmatprep.subr.bf16.mxu0 0
    %610 = vmatpush1.bf16.msra.mxu0 0
    %611 = vmatprep.subr.bf16.mxu0 0
    %612 = vmatpush1.bf16.msra.mxu0 0
    %613 = vmatprep.subr.bf16.mxu0 0
    %614 = vmatpush1.bf16.msra.mxu0 0
    %615 = vmatprep.subr.bf16.mxu0 0
    %616 = vmatpush1.bf16.msra.mxu0 0
    %617 = vmatprep.subr.bf16.mxu0 0
    %618 = vmatpush1.bf16.msra.mxu0 0
    %619 = vmatprep.subr.bf16.mxu0 0
    %620 = vmatpush1.bf16.msra.mxu0 0
    %621 = vmatprep.subr.bf16.mxu0 0
    %622 = vmatpush1.bf16.msra.mxu0 0
    %623 = vmatprep.subr.bf16.mxu0 0
    %624 = vmatpush1.bf16.msra.mxu0 0
    %625 = vmatprep.subr.bf16.mxu0 0
    %626 = vmatpush1.bf16.msra.mxu0 0
    %627 = vmatprep.subr.bf16.mxu0 0
    %628 = vmatpush1.bf16.msra.mxu0 0
    %629 = vmatprep.subr.bf16.mxu0 0
    %630 = vmatpush1.bf16.msra.mxu0 0
    %631 = vmatprep.mubr.bf16.mxu0 0
    %632 = vmatmul.mubr.bf16.gmra.mrb[0].mxu0 %v552
    %v633 = vpop.f32.mrb[0].mxu0
    %v634 = vadd.f32 %v536, %v633
    %v635 = vpop.f32.mrb[0].mxu0
    %v636 = vpop.f32.mrb[0].mxu0
    %v637 = vadd.f32 %v536, %v636
    %v638 = vpop.f32.mrb[0].mxu0
    %639 = vmatprep.mubr.bf16.mxu0 0
    %640 = vmatmul.mubr.bf16.gmra.mrb[0].mxu0 %v555
    %v641 = vpop.f32.mrb[0].mxu0
    %v642 = vadd.f32 %v536, %v641
    %v643 = vpop.f32.mrb[0].mxu0
    %v644 = vpop.f32.mrb[0].mxu0
    %v645 = vadd.f32 %v536, %v644
    %v646 = vpop.f32.mrb[0].mxu0
    %647 = vmatprep.mubr.bf16.mxu0 0
    %648 = vmatmul.mubr.bf16.gmra.mrb[0].mxu0 %v558
    %v649 = vpop.f32.mrb[0].mxu0
    %v650 = vadd.f32 %v536, %v649
    %v651 = vpop.f32.mrb[0].mxu0
    %v652 = vpop.f32.mrb[0].mxu0
    %v653 = vadd.f32 %v536, %v652
    %v654 = vpop.f32.mrb[0].mxu0
    %655 = vmatprep.mubr.bf16.mxu0 0
    %656 = vmatmul.mubr.bf16.gmra.mrb[0].mxu0 %v561
    %v657 = vpop.f32.mrb[0].mxu0
    %v658 = vadd.f32 %v536, %v657
    %v659 = vpop.f32.mrb[0].mxu0
    %v660 = vpop.f32.mrb[0].mxu0
    %v661 = vadd.f32 %v536, %v660
    %v662 = vpop.f32.mrb[0].mxu0
    %663 = vmatprep.mubr.bf16.mxu0 0
    %664 = vmatmul.mubr.bf16.gmra.mrb[0].mxu0 %v564
    %v665 = vpop.f32.mrb[0].mxu0
    %v666 = vadd.f32 %v536, %v665
    %v667 = vpop.f32.mrb[0].mxu0
    %v668 = vpop.f32.mrb[0].mxu0
    %v669 = vadd.f32 %v536, %v668
    %v670 = vpop.f32.mrb[0].mxu0
    %671 = vmatprep.mubr.bf16.mxu0 0
    %672 = vmatmul.mubr.bf16.gmra.mrb[0].mxu0 %v567
    %v673 = vpop.f32.mrb[0].mxu0
    %v674 = vadd.f32 %v536, %v673
    %v675 = vpop.f32.mrb[0].mxu0
    %v676 = vpop.f32.mrb[0].mxu0
    %v677 = vadd.f32 %v536, %v676
    %v678 = vpop.f32.mrb[0].mxu0
    %679 = vmatprep.mubr.bf16.mxu0 0
    %680 = vmatmul.mubr.bf16.gmra.mrb[0].mxu0 %v570
    %v681 = vpop.f32.mrb[0].mxu0
    %v682 = vadd.f32 %v536, %v681
    %v683 = vpop.f32.mrb[0].mxu0
    %v684 = vpop.f32.mrb[0].mxu0
    %v685 = vadd.f32 %v536, %v684
    %v686 = vpop.f32.mrb[0].mxu0
    %687 = vmatprep.mubr.bf16.mxu0 0
    %688 = vmatmul.mubr.bf16.gmra.mrb[0].mxu0 %v573
    %v689 = vpop.f32.mrb[0].mxu0
    %v690 = vadd.f32 %v536, %v689
    %v691 = vpop.f32.mrb[0].mxu0
    %v692 = vpop.f32.mrb[0].mxu0
    %v693 = vadd.f32 %v536, %v692
    %v694 = vpop.f32.mrb[0].mxu0
    %695 = vmatprep.mubr.bf16.mxu0 0
    %696 = vmatmul.mubr.bf16.gmra.mrb[0].mxu0 %v576
    %v697 = vpop.f32.mrb[0].mxu0
    %v698 = vadd.f32 %v536, %v697
    %v699 = vpop.f32.mrb[0].mxu0
    %v700 = vpop.f32.mrb[0].mxu0
    %v701 = vadd.f32 %v536, %v700
    %v702 = vpop.f32.mrb[0].mxu0
    %703 = vmatprep.mubr.bf16.mxu0 0
    %704 = vmatmul.mubr.bf16.gmra.mrb[0].mxu0 %v579
    %v705 = vpop.f32.mrb[0].mxu0
    %v706 = vadd.f32 %v536, %v705
    %v707 = vpop.f32.mrb[0].mxu0
    %v708 = vpop.f32.mrb[0].mxu0
    %v709 = vadd.f32 %v536, %v708
    %v710 = vpop.f32.mrb[0].mxu0
    %711 = vmatprep.mubr.bf16.mxu0 0
    %712 = vmatmul.mubr.bf16.gmra.mrb[0].mxu0 %v582
    %v713 = vpop.f32.mrb[0].mxu0
    %v714 = vadd.f32 %v536, %v713
    %v715 = vpop.f32.mrb[0].mxu0
    %v716 = vpop.f32.mrb[0].mxu0
    %v717 = vadd.f32 %v536, %v716
    %v718 = vpop.f32.mrb[0].mxu0
    %719 = vmatprep.mubr.bf16.mxu0 0
    %720 = vmatmul.mubr.bf16.gmra.mrb[0].mxu0 %v585
    %v721 = vpop.f32.mrb[0].mxu0
    %v722 = vadd.f32 %v536, %v721
    %v723 = vpop.f32.mrb[0].mxu0
    %v724 = vpop.f32.mrb[0].mxu0
    %v725 = vadd.f32 %v536, %v724
    %v726 = vpop.f32.mrb[0].mxu0
    %727 = vmatprep.mubr.bf16.mxu0 0
    %728 = vmatmul.mubr.bf16.gmra.mrb[0].mxu0 %v588
    %v729 = vpop.f32.mrb[0].mxu0
    %v730 = vadd.f32 %v536, %v729
    %v731 = vpop.f32.mrb[0].mxu0
    %v732 = vpop.f32.mrb[0].mxu0
    %v733 = vadd.f32 %v536, %v732
    %v734 = vpop.f32.mrb[0].mxu0
    %735 = vmatprep.mubr.bf16.mxu0 0
    %736 = vmatmul.mubr.bf16.gmra.mrb[0].mxu0 %v591
    %v737 = vpop.f32.mrb[0].mxu0
    %v738 = vadd.f32 %v536, %v737
    %v739 = vpop.f32.mrb[0].mxu0
    %v740 = vpop.f32.mrb[0].mxu0
    %v741 = vadd.f32 %v536, %v740
    %v742 = vpop.f32.mrb[0].mxu0
    %743 = vmatprep.mubr.bf16.mxu0 0
    %744 = vmatmul.mubr.bf16.gmra.mrb[0].mxu0 %v594
    %v745 = vpop.f32.mrb[0].mxu0
    %v746 = vadd.f32 %v536, %v745
    %v747 = vpop.f32.mrb[0].mxu0
    %v748 = vpop.f32.mrb[0].mxu0
    %v749 = vadd.f32 %v536, %v748
    %v750 = vpop.f32.mrb[0].mxu0
    %751 = vmatprep.mubr.bf16.mxu0 0
    %752 = vmatmul.mubr.bf16.gmra.mrb[0].mxu0 %v597
    %v753 = vpop.f32.mrb[0].mxu0
    %v754 = vadd.f32 %v536, %v753
    %v755 = vpop.f32.mrb[0].mxu0
    %v756 = vpop.f32.mrb[0].mxu0
    %v757 = vadd.f32 %v536, %v756
    %v758 = vpop.f32.mrb[0].mxu0
    %759 = vdwg.mxu0
    %v760 = vmul.f32 %v634, 0.1
    %v761 = vmul.f32 %v637, 0.1
    %v762 = vmul.f32 %v642, 0.1
    %v763 = vmul.f32 %v645, 0.1
    %v764 = vmul.f32 %v650, 0.1
    %v765 = vmul.f32 %v653, 0.1
    %v766 = vmul.f32 %v658, 0.1
    %v767 = vmul.f32 %v661, 0.1
    %v768 = vmul.f32 %v666, 0.1
    %v769 = vmul.f32 %v669, 0.1
    %v770 = vmul.f32 %v674, 0.1
    %v771 = vmul.f32 %v677, 0.1
    %v772 = vmul.f32 %v682, 0.1
    %v773 = vmul.f32 %v685, 0.1
    %v774 = vmul.f32 %v690, 0.1
    %v775 = vmul.f32 %v693, 0.1
    %v776 = vmul.f32 %v698, 0.1
    %v777 = vmul.f32 %v701, 0.1
    %v778 = vmul.f32 %v706, 0.1
    %v779 = vmul.f32 %v709, 0.1
    %v780 = vmul.f32 %v714, 0.1
    %v781 = vmul.f32 %v717, 0.1
    %v782 = vmul.f32 %v722, 0.1
    %v783 = vmul.f32 %v725, 0.1
    %v784 = vmul.f32 %v730, 0.1
    %v785 = vmul.f32 %v733, 0.1
    %v786 = vmul.f32 %v738, 0.1
    %v787 = vmul.f32 %v741, 0.1
    %v788 = vmul.f32 %v746, 0.1
    %v789 = vmul.f32 %v749, 0.1
    %v790 = vmul.f32 %v754, 0.1
    %v791 = vmul.f32 %v757, 0.1
    %v792 = vadd.f32 %v199, %v760
    %v793 = vadd.f32 %v200, %v761
    %v794 = vadd.f32 %v201, %v762
    %v795 = vadd.f32 %v202, %v763
    %v796 = vadd.f32 %v203, %v764
    %v797 = vadd.f32 %v204, %v765
    %v798 = vadd.f32 %v205, %v766
    %v799 = vadd.f32 %v206, %v767
    %v800 = vadd.f32 %v207, %v768
    %v801 = vadd.f32 %v208, %v769
    %v802 = vadd.f32 %v209, %v770
    %v803 = vadd.f32 %v210, %v771
    %v804 = vadd.f32 %v211, %v772
    %v805 = vadd.f32 %v212, %v773
    %v806 = vadd.f32 %v213, %v774
    %v807 = vadd.f32 %v214, %v775
    %v808 = vadd.f32 %v215, %v776
    %v809 = vadd.f32 %v216, %v777
    %v810 = vadd.f32 %v217, %v778
    %v811 = vadd.f32 %v218, %v779
    %v812 = vadd.f32 %v219, %v780
    %v813 = vadd.f32 %v220, %v781
    %v814 = vadd.f32 %v221, %v782
    %v815 = vadd.f32 %v222, %v783
    %v816 = vadd.f32 %v223, %v784
    %v817 = vadd.f32 %v224, %v785
    %v818 = vadd.f32 %v225, %v786
    %v819 = vadd.f32 %v226, %v787
    %v820 = vadd.f32 %v227, %v788
    %v821 = vadd.f32 %v228, %v789
    %v822 = vadd.f32 %v229, %v790
    %v823 = vadd.f32 %v230, %v791
    %v824 = vmul.f32 %v792, %v792
    %v825 = vmul.f32 %v793, %v793
    %v826 = vmul.f32 %v794, %v794
    %v827 = vmul.f32 %v795, %v795
    %v828 = vmul.f32 %v796, %v796
    %v829 = vmul.f32 %v797, %v797
    %v830 = vmul.f32 %v798, %v798
    %v831 = vmul.f32 %v799, %v799
    %v832 = vmul.f32 %v800, %v800
    %v833 = vmul.f32 %v801, %v801
    %v834 = vmul.f32 %v802, %v802
    %v835 = vmul.f32 %v803, %v803
    %v836 = vmul.f32 %v804, %v804
    %v837 = vmul.f32 %v805, %v805
    %v838 = vmul.f32 %v806, %v806
    %v839 = vmul.f32 %v807, %v807
    %v840 = vmul.f32 %v808, %v808
    %v841 = vmul.f32 %v809, %v809
    %v842 = vmul.f32 %v810, %v810
    %v843 = vmul.f32 %v811, %v811
    %v844 = vmul.f32 %v812, %v812
    %v845 = vmul.f32 %v813, %v813
    %v846 = vmul.f32 %v814, %v814
    %v847 = vmul.f32 %v815, %v815
    %v848 = vmul.f32 %v816, %v816
    %v849 = vmul.f32 %v817, %v817
    %v850 = vmul.f32 %v818, %v818
    %v851 = vmul.f32 %v819, %v819
    %v852 = vmul.f32 %v820, %v820
    %v853 = vmul.f32 %v821, %v821
    %v854 = vmul.f32 %v822, %v822
    %v855 = vmul.f32 %v823, %v823
    %856 = vadd.xlane.f32.xlu0 %v824
    %v857 = vpop.xlane.xlu0 %856
    %858 = vadd.xlane.f32.xlu0 %v825
    %v859 = vpop.xlane.xlu0 %858
    %860 = vadd.xlane.f32.xlu0 %v826
    %v861 = vpop.xlane.xlu0 %860
    %862 = vadd.xlane.f32.xlu0 %v827
    %v863 = vpop.xlane.xlu0 %862
    %864 = vadd.xlane.f32.xlu0 %v828
    %v865 = vpop.xlane.xlu0 %864
    %866 = vadd.xlane.f32.xlu0 %v829
    %v867 = vpop.xlane.xlu0 %866
    %868 = vadd.xlane.f32.xlu0 %v830
    %v869 = vpop.xlane.xlu0 %868
    %870 = vadd.xlane.f32.xlu0 %v831
    %v871 = vpop.xlane.xlu0 %870
    %872 = vadd.xlane.f32.xlu0 %v832
    %v873 = vpop.xlane.xlu0 %872
    %874 = vadd.xlane.f32.xlu0 %v833
    %v875 = vpop.xlane.xlu0 %874
    %876 = vadd.xlane.f32.xlu0 %v834
    %v877 = vpop.xlane.xlu0 %876
    %878 = vadd.xlane.f32.xlu0 %v835
    %v879 = vpop.xlane.xlu0 %878
    %880 = vadd.xlane.f32.xlu0 %v836
    %v881 = vpop.xlane.xlu0 %880
    %882 = vadd.xlane.f32.xlu0 %v837
    %v883 = vpop.xlane.xlu0 %882
    %884 = vadd.xlane.f32.xlu0 %v838
    %v885 = vpop.xlane.xlu0 %884
    %886 = vadd.xlane.f32.xlu0 %v839
    %v887 = vpop.xlane.xlu0 %886
    %888 = vadd.xlane.f32.xlu0 %v840
    %v889 = vpop.xlane.xlu0 %888
    %890 = vadd.xlane.f32.xlu0 %v841
    %v891 = vpop.xlane.xlu0 %890
    %892 = vadd.xlane.f32.xlu0 %v842
    %v893 = vpop.xlane.xlu0 %892
    %894 = vadd.xlane.f32.xlu0 %v843
    %v895 = vpop.xlane.xlu0 %894
    %896 = vadd.xlane.f32.xlu0 %v844
    %v897 = vpop.xlane.xlu0 %896
    %898 = vadd.xlane.f32.xlu0 %v845
    %v899 = vpop.xlane.xlu0 %898
    %900 = vadd.xlane.f32.xlu0 %v846
    %v901 = vpop.xlane.xlu0 %900
    %902 = vadd.xlane.f32.xlu0 %v847
    %v903 = vpop.xlane.xlu0 %902
    %904 = vadd.xlane.f32.xlu0 %v848
    %v905 = vpop.xlane.xlu0 %904
    %906 = vadd.xlane.f32.xlu0 %v849
    %v907 = vpop.xlane.xlu0 %906
    %908 = vadd.xlane.f32.xlu0 %v850
    %v909 = vpop.xlane.xlu0 %908
    %910 = vadd.xlane.f32.xlu0 %v851
    %v911 = vpop.xlane.xlu0 %910
    %912 = vadd.xlane.f32.xlu0 %v852
    %v913 = vpop.xlane.xlu0 %912
    %914 = vadd.xlane.f32.xlu0 %v853
    %v915 = vpop.xlane.xlu0 %914
    %916 = vadd.xlane.f32.xlu0 %v854
    %v917 = vpop.xlane.xlu0 %916
    %918 = vadd.xlane.f32.xlu0 %v855
    %v919 = vpop.xlane.xlu0 %918
    %v920 = vrsqrt.pop %v857
    %v921 = vrsqrt.pop %v859
    %v922 = vrsqrt.pop %v861
    %v923 = vrsqrt.pop %v863
    %v924 = vrsqrt.pop %v865
    %v925 = vrsqrt.pop %v867
    %v926 = vrsqrt.pop %v869
    %v927 = vrsqrt.pop %v871
    %v928 = vrsqrt.pop %v873
    %v929 = vrsqrt.pop %v875
    %v930 = vrsqrt.pop %v877
    %v931 = vrsqrt.pop %v879
    %v932 = vrsqrt.pop %v881
    %v933 = vrsqrt.pop %v883
    %v934 = vrsqrt.pop %v885
    %v935 = vrsqrt.pop %v887
    %v936 = vrsqrt.pop %v889
    %v937 = vrsqrt.pop %v891
    %v938 = vrsqrt.pop %v893
    %v939 = vrsqrt.pop %v895
    %v940 = vrsqrt.pop %v897
    %v941 = vrsqrt.pop %v899
    %v942 = vrsqrt.pop %v901
    %v943 = vrsqrt.pop %v903
    %v944 = vrsqrt.pop %v905
    %v945 = vrsqrt.pop %v907
    %v946 = vrsqrt.pop %v909
    %v947 = vrsqrt.pop %v911
    %v948 = vrsqrt.pop %v913
    %v949 = vrsqrt.pop %v915
    %v950 = vrsqrt.pop %v917
    %v951 = vrsqrt.pop %v919
    %v952 = vmul.f32 %v792, %v920
    %v953 = vmul.f32 %v793, %v921
    %v954 = vmul.f32 %v794, %v922
    %v955 = vmul.f32 %v795, %v923
    %v956 = vmul.f32 %v796, %v924
    %v957 = vmul.f32 %v797, %v925
    %v958 = vmul.f32 %v798, %v926
    %v959 = vmul.f32 %v799, %v927
    %v960 = vmul.f32 %v800, %v928
    %v961 = vmul.f32 %v801, %v929
    %v962 = vmul.f32 %v802, %v930
    %v963 = vmul.f32 %v803, %v931
    %v964 = vmul.f32 %v804, %v932
    %v965 = vmul.f32 %v805, %v933
    %v966 = vmul.f32 %v806, %v934
    %v967 = vmul.f32 %v807, %v935
    %v968 = vmul.f32 %v808, %v936
    %v969 = vmul.f32 %v809, %v937
    %v970 = vmul.f32 %v810, %v938
    %v971 = vmul.f32 %v811, %v939
    %v972 = vmul.f32 %v812, %v940
    %v973 = vmul.f32 %v813, %v941
    %v974 = vmul.f32 %v814, %v942
    %v975 = vmul.f32 %v815, %v943
    %v976 = vmul.f32 %v816, %v944
    %v977 = vmul.f32 %v817, %v945
    %v978 = vmul.f32 %v818, %v946
    %v979 = vmul.f32 %v819, %v947
    %v980 = vmul.f32 %v820, %v948
    %v981 = vmul.f32 %v821, %v949
    %v982 = vmul.f32 %v822, %v950
    %v983 = vmul.f32 %v823, %v951
    %v984 = vld [vmem:[%s5] sm:$0xf]
    %v985 = vld [vmem:[%s5 + $0x4] sm:$0xf]
    %v986 = vpack.c.bf16 %v953, %v952
    %v987 = vpack.c.bf16 %v955, %v954
    %v988 = vpack.c.bf16 %v957, %v956
    %v989 = vpack.c.bf16 %v959, %v958
    %v990 = vpack.c.bf16 %v961, %v960
    %v991 = vpack.c.bf16 %v963, %v962
    %v992 = vpack.c.bf16 %v965, %v964
    %v993 = vpack.c.bf16 %v967, %v966
    %v994 = vpack.c.bf16 %v969, %v968
    %v995 = vpack.c.bf16 %v971, %v970
    %v996 = vpack.c.bf16 %v973, %v972
    %v997 = vpack.c.bf16 %v975, %v974
    %v998 = vpack.c.bf16 %v977, %v976
    %v999 = vpack.c.bf16 %v979, %v978
    %v1000 = vpack.c.bf16 %v981, %v980
    %v1001 = vpack.c.bf16 %v983, %v982
    %v1004 = vunpack.c.l.b16 %v984
    %v1005 = vunpack.c.l.b16 %v985
    %v1006 = vpack.c.b16 %v1005, %v1004
    %1008 = vmatprep.subr.bf16.mxu0 0
    %1009 = vmatpush1.bf16.xpose.msra.mxu0 %v1006
    %1010 = vmatprep.subr.bf16.mxu0 0
    %1011 = vmatpush1.bf16.xpose.msra.mxu0 0
    %1012 = vmatprep.subr.bf16.mxu0 0
    %1013 = vmatpush1.bf16.xpose.msra.mxu0 0
    %1014 = vmatprep.subr.bf16.mxu0 0
    %1015 = vmatpush1.bf16.xpose.msra.mxu0 0
    %1016 = vmatprep.subr.bf16.mxu0 0
    %1017 = vmatpush1.bf16.xpose.msra.mxu0 0
    %1018 = vmatprep.subr.bf16.mxu0 0
    %1019 = vmatpush1.bf16.xpose.msra.mxu0 0
    %1020 = vmatprep.subr.bf16.mxu0 0
    %1021 = vmatpush1.bf16.xpose.msra.mxu0 0
    %1022 = vmatprep.subr.bf16.mxu0 0
    %1023 = vmatpush1.bf16.xpose.msra.mxu0 0
    %1024 = vmatprep.subr.bf16.mxu0 0
    %1025 = vmatpush1.bf16.xpose.msra.mxu0 0
    %1026 = vmatprep.subr.bf16.mxu0 0
    %1027 = vmatpush1.bf16.xpose.msra.mxu0 0
    %1028 = vmatprep.subr.bf16.mxu0 0
    %1029 = vmatpush1.bf16.xpose.msra.mxu0 0
    %1030 = vmatprep.subr.bf16.mxu0 0
    %1031 = vmatpush1.bf16.xpose.msra.mxu0 0
    %1032 = vmatprep.subr.bf16.mxu0 0
    %1033 = vmatpush1.bf16.xpose.msra.mxu0 0
    %1034 = vmatprep.subr.bf16.mxu0 0
    %1035 = vmatpush1.bf16.xpose.msra.mxu0 0
    %1036 = vmatprep.subr.bf16.mxu0 0
    %1037 = vmatpush1.bf16.xpose.msra.mxu0 0
    %1038 = vmatprep.subr.bf16.mxu0 0
    %1039 = vmatpush1.bf16.xpose.msra.mxu0 0
    %1040 = vmatprep.mubr.bf16.mxu0 0
    %1041 = vmatmul.mubr.bf16.gmra.mrb[0].mxu0 %v986
    %v1042 = vpop.f32.mrb[0].mxu0
    %v1043 = vadd.f32 0.0, %v1042
    %v1044 = vpop.f32.mrb[0].mxu0
    %v1045 = vpop.f32.mrb[0].mxu0
    %v1046 = vadd.f32 0.0, %v1045
    %v1047 = vpop.f32.mrb[0].mxu0
    %1048 = vmatprep.mubr.bf16.mxu0 0
    %1049 = vmatmul.mubr.bf16.gmra.mrb[0].mxu0 %v987
    %v1050 = vpop.f32.mrb[0].mxu0
    %v1051 = vadd.f32 0.0, %v1050
    %v1052 = vpop.f32.mrb[0].mxu0
    %v1053 = vpop.f32.mrb[0].mxu0
    %v1054 = vadd.f32 0.0, %v1053
    %v1055 = vpop.f32.mrb[0].mxu0
    %1056 = vmatprep.mubr.bf16.mxu0 0
    %1057 = vmatmul.mubr.bf16.gmra.mrb[0].mxu0 %v988
    %v1058 = vpop.f32.mrb[0].mxu0
    %v1059 = vadd.f32 0.0, %v1058
    %v1060 = vpop.f32.mrb[0].mxu0
    %v1061 = vpop.f32.mrb[0].mxu0
    %v1062 = vadd.f32 0.0, %v1061
    %v1063 = vpop.f32.mrb[0].mxu0
    %1064 = vmatprep.mubr.bf16.mxu0 0
    %1065 = vmatmul.mubr.bf16.gmra.mrb[0].mxu0 %v989
    %v1066 = vpop.f32.mrb[0].mxu0
    %v1067 = vadd.f32 0.0, %v1066
    %v1068 = vpop.f32.mrb[0].mxu0
    %v1069 = vpop.f32.mrb[0].mxu0
    %v1070 = vadd.f32 0.0, %v1069
    %v1071 = vpop.f32.mrb[0].mxu0
    %1072 = vmatprep.mubr.bf16.mxu0 0
    %1073 = vmatmul.mubr.bf16.gmra.mrb[0].mxu0 %v990
    %v1074 = vpop.f32.mrb[0].mxu0
    %v1075 = vadd.f32 0.0, %v1074
    %v1076 = vpop.f32.mrb[0].mxu0
    %v1077 = vpop.f32.mrb[0].mxu0
    %v1078 = vadd.f32 0.0, %v1077
    %v1079 = vpop.f32.mrb[0].mxu0
    %1080 = vmatprep.mubr.bf16.mxu0 0
    %1081 = vmatmul.mubr.bf16.gmra.mrb[0].mxu0 %v991
    %v1082 = vpop.f32.mrb[0].mxu0
    %v1083 = vadd.f32 0.0, %v1082
    %v1084 = vpop.f32.mrb[0].mxu0
    %v1085 = vpop.f32.mrb[0].mxu0
    %v1086 = vadd.f32 0.0, %v1085
    %v1087 = vpop.f32.mrb[0].mxu0
    %1088 = vmatprep.mubr.bf16.mxu0 0
    %1089 = vmatmul.mubr.bf16.gmra.mrb[0].mxu0 %v992
    %v1090 = vpop.f32.mrb[0].mxu0
    %v1091 = vadd.f32 0.0, %v1090
    %v1092 = vpop.f32.mrb[0].mxu0
    %v1093 = vpop.f32.mrb[0].mxu0
    %v1094 = vadd.f32 0.0, %v1093
    %v1095 = vpop.f32.mrb[0].mxu0
    %1096 = vmatprep.mubr.bf16.mxu0 0
    %1097 = vmatmul.mubr.bf16.gmra.mrb[0].mxu0 %v993
    %v1098 = vpop.f32.mrb[0].mxu0
    %v1099 = vadd.f32 0.0, %v1098
    %v1100 = vpop.f32.mrb[0].mxu0
    %v1101 = vpop.f32.mrb[0].mxu0
    %v1102 = vadd.f32 0.0, %v1101
    %v1103 = vpop.f32.mrb[0].mxu0
    %1104 = vmatprep.mubr.bf16.mxu0 0
    %1105 = vmatmul.mubr.bf16.gmra.mrb[0].mxu0 %v994
    %v1106 = vpop.f32.mrb[0].mxu0
    %v1107 = vadd.f32 0.0, %v1106
    %v1108 = vpop.f32.mrb[0].mxu0
    %v1109 = vpop.f32.mrb[0].mxu0
    %v1110 = vadd.f32 0.0, %v1109
    %v1111 = vpop.f32.mrb[0].mxu0
    %1112 = vmatprep.mubr.bf16.mxu0 0
    %1113 = vmatmul.mubr.bf16.gmra.mrb[0].mxu0 %v995
    %v1114 = vpop.f32.mrb[0].mxu0
    %v1115 = vadd.f32 0.0, %v1114
    %v1116 = vpop.f32.mrb[0].mxu0
    %v1117 = vpop.f32.mrb[0].mxu0
    %v1118 = vadd.f32 0.0, %v1117
    %v1119 = vpop.f32.mrb[0].mxu0
    %1120 = vmatprep.mubr.bf16.mxu0 0
    %1121 = vmatmul.mubr.bf16.gmra.mrb[0].mxu0 %v996
    %v1122 = vpop.f32.mrb[0].mxu0
    %v1123 = vadd.f32 0.0, %v1122
    %v1124 = vpop.f32.mrb[0].mxu0
    %v1125 = vpop.f32.mrb[0].mxu0
    %v1126 = vadd.f32 0.0, %v1125
    %v1127 = vpop.f32.mrb[0].mxu0
    %1128 = vmatprep.mubr.bf16.mxu0 0
    %1129 = vmatmul.mubr.bf16.gmra.mrb[0].mxu0 %v997
    %v1130 = vpop.f32.mrb[0].mxu0
    %v1131 = vadd.f32 0.0, %v1130
    %v1132 = vpop.f32.mrb[0].mxu0
    %v1133 = vpop.f32.mrb[0].mxu0
    %v1134 = vadd.f32 0.0, %v1133
    %v1135 = vpop.f32.mrb[0].mxu0
    %1136 = vmatprep.mubr.bf16.mxu0 0
    %1137 = vmatmul.mubr.bf16.gmra.mrb[0].mxu0 %v998
    %v1138 = vpop.f32.mrb[0].mxu0
    %v1139 = vadd.f32 0.0, %v1138
    %v1140 = vpop.f32.mrb[0].mxu0
    %v1141 = vpop.f32.mrb[0].mxu0
    %v1142 = vadd.f32 0.0, %v1141
    %v1143 = vpop.f32.mrb[0].mxu0
    %1144 = vmatprep.mubr.bf16.mxu0 0
    %1145 = vmatmul.mubr.bf16.gmra.mrb[0].mxu0 %v999
    %v1146 = vpop.f32.mrb[0].mxu0
    %v1147 = vadd.f32 0.0, %v1146
    %v1148 = vpop.f32.mrb[0].mxu0
    %v1149 = vpop.f32.mrb[0].mxu0
    %v1150 = vadd.f32 0.0, %v1149
    %v1151 = vpop.f32.mrb[0].mxu0
    %1152 = vmatprep.mubr.bf16.mxu0 0
    %1153 = vmatmul.mubr.bf16.gmra.mrb[0].mxu0 %v1000
    %v1154 = vpop.f32.mrb[0].mxu0
    %v1155 = vadd.f32 0.0, %v1154
    %v1156 = vpop.f32.mrb[0].mxu0
    %v1157 = vpop.f32.mrb[0].mxu0
    %v1158 = vadd.f32 0.0, %v1157
    %v1159 = vpop.f32.mrb[0].mxu0
    %1160 = vmatprep.mubr.bf16.mxu0 0
    %1161 = vmatmul.mubr.bf16.gmra.mrb[0].mxu0 %v1001
    %v1162 = vpop.f32.mrb[0].mxu0
    %v1163 = vadd.f32 0.0, %v1162
    %v1164 = vpop.f32.mrb[0].mxu0
    %v1165 = vpop.f32.mrb[0].mxu0
    %v1166 = vadd.f32 0.0, %v1165
    %v1167 = vpop.f32.mrb[0].mxu0
    %1168 = vdwg.mxu0
    %v1169 = vtanh.pop %v1043
    %v1170 = vtanh.pop %v1046
    %v1171 = vtanh.pop %v1051
    %v1172 = vtanh.pop %v1054
    %v1173 = vtanh.pop %v1059
    %v1174 = vtanh.pop %v1062
    %v1175 = vtanh.pop %v1067
    %v1176 = vtanh.pop %v1070
    %v1177 = vtanh.pop %v1075
    %v1178 = vtanh.pop %v1078
    %v1179 = vtanh.pop %v1083
    %v1180 = vtanh.pop %v1086
    %v1181 = vtanh.pop %v1091
    %v1182 = vtanh.pop %v1094
    %v1183 = vtanh.pop %v1099
    %v1184 = vtanh.pop %v1102
    %v1185 = vtanh.pop %v1107
    %v1186 = vtanh.pop %v1110
    %v1187 = vtanh.pop %v1115
    %v1188 = vtanh.pop %v1118
    %v1189 = vtanh.pop %v1123
    %v1190 = vtanh.pop %v1126
    %v1191 = vtanh.pop %v1131
    %v1192 = vtanh.pop %v1134
    %v1193 = vtanh.pop %v1139
    %v1194 = vtanh.pop %v1142
    %v1195 = vtanh.pop %v1147
    %v1196 = vtanh.pop %v1150
    %v1197 = vtanh.pop %v1155
    %v1198 = vtanh.pop %v1158
    %v1199 = vtanh.pop %v1163
    %v1200 = vtanh.pop %v1166
    %v1201 = vpack.c.bf16 %v1170, %v1169
    %v1202 = vpack.c.bf16 %v1172, %v1171
    %v1203 = vpack.c.bf16 %v1174, %v1173
    %v1204 = vpack.c.bf16 %v1176, %v1175
    %v1205 = vpack.c.bf16 %v1178, %v1177
    %v1206 = vpack.c.bf16 %v1180, %v1179
    %v1207 = vpack.c.bf16 %v1182, %v1181
    %v1208 = vpack.c.bf16 %v1184, %v1183
    %v1209 = vpack.c.bf16 %v1186, %v1185
    %v1210 = vpack.c.bf16 %v1188, %v1187
    %v1211 = vpack.c.bf16 %v1190, %v1189
    %v1212 = vpack.c.bf16 %v1192, %v1191
    %v1213 = vpack.c.bf16 %v1194, %v1193
    %v1214 = vpack.c.bf16 %v1196, %v1195
    %v1215 = vpack.c.bf16 %v1198, %v1197
    %v1216 = vpack.c.bf16 %v1200, %v1199
    %vm1217 = vcmask 130048
    %v1219 = vsel %vm1217, %v1201, 0
    %v1222 = vsel %vm1217, %v1202, 0
    %v1225 = vsel %vm1217, %v1203, 0
    %v1228 = vsel %vm1217, %v1204, 0
    %v1231 = vsel %vm1217, %v1205, 0
    %v1234 = vsel %vm1217, %v1206, 0
    %v1237 = vsel %vm1217, %v1207, 0
    %v1240 = vsel %vm1217, %v1208, 0
    %v1243 = vsel %vm1217, %v1209, 0
    %v1246 = vsel %vm1217, %v1210, 0
    %v1249 = vsel %vm1217, %v1211, 0
    %v1252 = vsel %vm1217, %v1212, 0
    %v1255 = vsel %vm1217, %v1213, 0
    %v1258 = vsel %vm1217, %v1214, 0
    %v1261 = vsel %vm1217, %v1215, 0
    %v1264 = vsel %vm1217, %v1216, 0
    %1266 = vmatprep.subr.bf16.mxu0 0
    %1267 = vmatpush1.bf16.msra.mxu0 %v1006
    %1268 = vmatprep.subr.bf16.mxu0 0
    %1269 = vmatpush1.bf16.msra.mxu0 0
    %1270 = vmatprep.subr.bf16.mxu0 0
    %1271 = vmatpush1.bf16.msra.mxu0 0
    %1272 = vmatprep.subr.bf16.mxu0 0
    %1273 = vmatpush1.bf16.msra.mxu0 0
    %1274 = vmatprep.subr.bf16.mxu0 0
    %1275 = vmatpush1.bf16.msra.mxu0 0
    %1276 = vmatprep.subr.bf16.mxu0 0
    %1277 = vmatpush1.bf16.msra.mxu0 0
    %1278 = vmatprep.subr.bf16.mxu0 0
    %1279 = vmatpush1.bf16.msra.mxu0 0
    %1280 = vmatprep.subr.bf16.mxu0 0
    %1281 = vmatpush1.bf16.msra.mxu0 0
    %1282 = vmatprep.subr.bf16.mxu0 0
    %1283 = vmatpush1.bf16.msra.mxu0 0
    %1284 = vmatprep.subr.bf16.mxu0 0
    %1285 = vmatpush1.bf16.msra.mxu0 0
    %1286 = vmatprep.subr.bf16.mxu0 0
    %1287 = vmatpush1.bf16.msra.mxu0 0
    %1288 = vmatprep.subr.bf16.mxu0 0
    %1289 = vmatpush1.bf16.msra.mxu0 0
    %1290 = vmatprep.subr.bf16.mxu0 0
    %1291 = vmatpush1.bf16.msra.mxu0 0
    %1292 = vmatprep.subr.bf16.mxu0 0
    %1293 = vmatpush1.bf16.msra.mxu0 0
    %1294 = vmatprep.subr.bf16.mxu0 0
    %1295 = vmatpush1.bf16.msra.mxu0 0
    %1296 = vmatprep.subr.bf16.mxu0 0
    %1297 = vmatpush1.bf16.msra.mxu0 0
    %1298 = vmatprep.mubr.bf16.mxu0 0
    %1299 = vmatmul.mubr.bf16.gmra.mrb[0].mxu0 %v1219
    %v1300 = vpop.f32.mrb[0].mxu0
    %v1301 = vadd.f32 0.0, %v1300
    %v1302 = vpop.f32.mrb[0].mxu0
    %v1303 = vpop.f32.mrb[0].mxu0
    %v1304 = vadd.f32 0.0, %v1303
    %v1305 = vpop.f32.mrb[0].mxu0
    %1306 = vmatprep.mubr.bf16.mxu0 0
    %1307 = vmatmul.mubr.bf16.gmra.mrb[0].mxu0 %v1222
    %v1308 = vpop.f32.mrb[0].mxu0
    %v1309 = vadd.f32 0.0, %v1308
    %v1310 = vpop.f32.mrb[0].mxu0
    %v1311 = vpop.f32.mrb[0].mxu0
    %v1312 = vadd.f32 0.0, %v1311
    %v1313 = vpop.f32.mrb[0].mxu0
    %1314 = vmatprep.mubr.bf16.mxu0 0
    %1315 = vmatmul.mubr.bf16.gmra.mrb[0].mxu0 %v1225
    %v1316 = vpop.f32.mrb[0].mxu0
    %v1317 = vadd.f32 0.0, %v1316
    %v1318 = vpop.f32.mrb[0].mxu0
    %v1319 = vpop.f32.mrb[0].mxu0
    %v1320 = vadd.f32 0.0, %v1319
    %v1321 = vpop.f32.mrb[0].mxu0
    %1322 = vmatprep.mubr.bf16.mxu0 0
    %1323 = vmatmul.mubr.bf16.gmra.mrb[0].mxu0 %v1228
    %v1324 = vpop.f32.mrb[0].mxu0
    %v1325 = vadd.f32 0.0, %v1324
    %v1326 = vpop.f32.mrb[0].mxu0
    %v1327 = vpop.f32.mrb[0].mxu0
    %v1328 = vadd.f32 0.0, %v1327
    %v1329 = vpop.f32.mrb[0].mxu0
    %1330 = vmatprep.mubr.bf16.mxu0 0
    %1331 = vmatmul.mubr.bf16.gmra.mrb[0].mxu0 %v1231
    %v1332 = vpop.f32.mrb[0].mxu0
    %v1333 = vadd.f32 0.0, %v1332
    %v1334 = vpop.f32.mrb[0].mxu0
    %v1335 = vpop.f32.mrb[0].mxu0
    %v1336 = vadd.f32 0.0, %v1335
    %v1337 = vpop.f32.mrb[0].mxu0
    %1338 = vmatprep.mubr.bf16.mxu0 0
    %1339 = vmatmul.mubr.bf16.gmra.mrb[0].mxu0 %v1234
    %v1340 = vpop.f32.mrb[0].mxu0
    %v1341 = vadd.f32 0.0, %v1340
    %v1342 = vpop.f32.mrb[0].mxu0
    %v1343 = vpop.f32.mrb[0].mxu0
    %v1344 = vadd.f32 0.0, %v1343
    %v1345 = vpop.f32.mrb[0].mxu0
    %1346 = vmatprep.mubr.bf16.mxu0 0
    %1347 = vmatmul.mubr.bf16.gmra.mrb[0].mxu0 %v1237
    %v1348 = vpop.f32.mrb[0].mxu0
    %v1349 = vadd.f32 0.0, %v1348
    %v1350 = vpop.f32.mrb[0].mxu0
    %v1351 = vpop.f32.mrb[0].mxu0
    %v1352 = vadd.f32 0.0, %v1351
    %v1353 = vpop.f32.mrb[0].mxu0
    %1354 = vmatprep.mubr.bf16.mxu0 0
    %1355 = vmatmul.mubr.bf16.gmra.mrb[0].mxu0 %v1240
    %v1356 = vpop.f32.mrb[0].mxu0
    %v1357 = vadd.f32 0.0, %v1356
    %v1358 = vpop.f32.mrb[0].mxu0
    %v1359 = vpop.f32.mrb[0].mxu0
    %v1360 = vadd.f32 0.0, %v1359
    %v1361 = vpop.f32.mrb[0].mxu0
    %1362 = vmatprep.mubr.bf16.mxu0 0
    %1363 = vmatmul.mubr.bf16.gmra.mrb[0].mxu0 %v1243
    %v1364 = vpop.f32.mrb[0].mxu0
    %v1365 = vadd.f32 0.0, %v1364
    %v1366 = vpop.f32.mrb[0].mxu0
    %v1367 = vpop.f32.mrb[0].mxu0
    %v1368 = vadd.f32 0.0, %v1367
    %v1369 = vpop.f32.mrb[0].mxu0
    %1370 = vmatprep.mubr.bf16.mxu0 0
    %1371 = vmatmul.mubr.bf16.gmra.mrb[0].mxu0 %v1246
    %v1372 = vpop.f32.mrb[0].mxu0
    %v1373 = vadd.f32 0.0, %v1372
    %v1374 = vpop.f32.mrb[0].mxu0
    %v1375 = vpop.f32.mrb[0].mxu0
    %v1376 = vadd.f32 0.0, %v1375
    %v1377 = vpop.f32.mrb[0].mxu0
    %1378 = vmatprep.mubr.bf16.mxu0 0
    %1379 = vmatmul.mubr.bf16.gmra.mrb[0].mxu0 %v1249
    %v1380 = vpop.f32.mrb[0].mxu0
    %v1381 = vadd.f32 0.0, %v1380
    %v1382 = vpop.f32.mrb[0].mxu0
    %v1383 = vpop.f32.mrb[0].mxu0
    %v1384 = vadd.f32 0.0, %v1383
    %v1385 = vpop.f32.mrb[0].mxu0
    %1386 = vmatprep.mubr.bf16.mxu0 0
    %1387 = vmatmul.mubr.bf16.gmra.mrb[0].mxu0 %v1252
    %v1388 = vpop.f32.mrb[0].mxu0
    %v1389 = vadd.f32 0.0, %v1388
    %v1390 = vpop.f32.mrb[0].mxu0
    %v1391 = vpop.f32.mrb[0].mxu0
    %v1392 = vadd.f32 0.0, %v1391
    %v1393 = vpop.f32.mrb[0].mxu0
    %1394 = vmatprep.mubr.bf16.mxu0 0
    %1395 = vmatmul.mubr.bf16.gmra.mrb[0].mxu0 %v1255
    %v1396 = vpop.f32.mrb[0].mxu0
    %v1397 = vadd.f32 0.0, %v1396
    %v1398 = vpop.f32.mrb[0].mxu0
    %v1399 = vpop.f32.mrb[0].mxu0
    %v1400 = vadd.f32 0.0, %v1399
    %v1401 = vpop.f32.mrb[0].mxu0
    %1402 = vmatprep.mubr.bf16.mxu0 0
    %1403 = vmatmul.mubr.bf16.gmra.mrb[0].mxu0 %v1258
    %v1404 = vpop.f32.mrb[0].mxu0
    %v1405 = vadd.f32 0.0, %v1404
    %v1406 = vpop.f32.mrb[0].mxu0
    %v1407 = vpop.f32.mrb[0].mxu0
    %v1408 = vadd.f32 0.0, %v1407
    %v1409 = vpop.f32.mrb[0].mxu0
    %1410 = vmatprep.mubr.bf16.mxu0 0
    %1411 = vmatmul.mubr.bf16.gmra.mrb[0].mxu0 %v1261
    %v1412 = vpop.f32.mrb[0].mxu0
    %v1413 = vadd.f32 0.0, %v1412
    %v1414 = vpop.f32.mrb[0].mxu0
    %v1415 = vpop.f32.mrb[0].mxu0
    %v1416 = vadd.f32 0.0, %v1415
    %v1417 = vpop.f32.mrb[0].mxu0
    %1418 = vmatprep.mubr.bf16.mxu0 0
    %1419 = vmatmul.mubr.bf16.gmra.mrb[0].mxu0 %v1264
    %v1420 = vpop.f32.mrb[0].mxu0
    %v1421 = vadd.f32 0.0, %v1420
    %v1422 = vpop.f32.mrb[0].mxu0
    %v1423 = vpop.f32.mrb[0].mxu0
    %v1424 = vadd.f32 0.0, %v1423
    %v1425 = vpop.f32.mrb[0].mxu0
    %1426 = vdwg.mxu0
    %v1427 = vmul.f32 %v39, 0.5
    %v1428 = vmul.f32 %v40, 0.5
    %v1429 = vmul.f32 %v41, 0.5
    %v1430 = vmul.f32 %v42, 0.5
    %v1431 = vmul.f32 %v43, 0.5
    %v1432 = vmul.f32 %v44, 0.5
    %v1433 = vmul.f32 %v45, 0.5
    %v1434 = vmul.f32 %v46, 0.5
    %v1435 = vmul.f32 %v47, 0.5
    %v1436 = vmul.f32 %v48, 0.5
    %v1437 = vmul.f32 %v49, 0.5
    %v1438 = vmul.f32 %v50, 0.5
    %v1439 = vmul.f32 %v51, 0.5
    %v1440 = vmul.f32 %v52, 0.5
    %v1441 = vmul.f32 %v53, 0.5
    %v1442 = vmul.f32 %v54, 0.5
    %v1443 = vmul.f32 %v55, 0.5
    %v1444 = vmul.f32 %v56, 0.5
    %v1445 = vmul.f32 %v57, 0.5
    %v1446 = vmul.f32 %v58, 0.5
    %v1447 = vmul.f32 %v59, 0.5
    %v1448 = vmul.f32 %v60, 0.5
    %v1449 = vmul.f32 %v61, 0.5
    %v1450 = vmul.f32 %v62, 0.5
    %v1451 = vmul.f32 %v63, 0.5
    %v1452 = vmul.f32 %v64, 0.5
    %v1453 = vmul.f32 %v65, 0.5
    %v1454 = vmul.f32 %v66, 0.5
    %v1455 = vmul.f32 %v67, 0.5
    %v1456 = vmul.f32 %v68, 0.5
    %v1457 = vmul.f32 %v69, 0.5
    %v1458 = vmul.f32 %v70, 0.5
    %v1459 = vmul.f32 %v1301, 0.5
    %v1460 = vmul.f32 %v1304, 0.5
    %v1461 = vmul.f32 %v1309, 0.5
    %v1462 = vmul.f32 %v1312, 0.5
    %v1463 = vmul.f32 %v1317, 0.5
    %v1464 = vmul.f32 %v1320, 0.5
    %v1465 = vmul.f32 %v1325, 0.5
    %v1466 = vmul.f32 %v1328, 0.5
    %v1467 = vmul.f32 %v1333, 0.5
    %v1468 = vmul.f32 %v1336, 0.5
    %v1469 = vmul.f32 %v1341, 0.5
    %v1470 = vmul.f32 %v1344, 0.5
    %v1471 = vmul.f32 %v1349, 0.5
    %v1472 = vmul.f32 %v1352, 0.5
    %v1473 = vmul.f32 %v1357, 0.5
    %v1474 = vmul.f32 %v1360, 0.5
    %v1475 = vmul.f32 %v1365, 0.5
    %v1476 = vmul.f32 %v1368, 0.5
    %v1477 = vmul.f32 %v1373, 0.5
    %v1478 = vmul.f32 %v1376, 0.5
    %v1479 = vmul.f32 %v1381, 0.5
    %v1480 = vmul.f32 %v1384, 0.5
    %v1481 = vmul.f32 %v1389, 0.5
    %v1482 = vmul.f32 %v1392, 0.5
    %v1483 = vmul.f32 %v1397, 0.5
    %v1484 = vmul.f32 %v1400, 0.5
    %v1485 = vmul.f32 %v1405, 0.5
    %v1486 = vmul.f32 %v1408, 0.5
    %v1487 = vmul.f32 %v1413, 0.5
    %v1488 = vmul.f32 %v1416, 0.5
    %v1489 = vmul.f32 %v1421, 0.5
    %v1490 = vmul.f32 %v1424, 0.5
    %v1491 = vadd.f32 %v1427, %v1459
    %v1492 = vadd.f32 %v1428, %v1460
    %v1493 = vadd.f32 %v1429, %v1461
    %v1494 = vadd.f32 %v1430, %v1462
    %v1495 = vadd.f32 %v1431, %v1463
    %v1496 = vadd.f32 %v1432, %v1464
    %v1497 = vadd.f32 %v1433, %v1465
    %v1498 = vadd.f32 %v1434, %v1466
    %v1499 = vadd.f32 %v1435, %v1467
    %v1500 = vadd.f32 %v1436, %v1468
    %v1501 = vadd.f32 %v1437, %v1469
    %v1502 = vadd.f32 %v1438, %v1470
    %v1503 = vadd.f32 %v1439, %v1471
    %v1504 = vadd.f32 %v1440, %v1472
    %v1505 = vadd.f32 %v1441, %v1473
    %v1506 = vadd.f32 %v1442, %v1474
    %v1507 = vadd.f32 %v1443, %v1475
    %v1508 = vadd.f32 %v1444, %v1476
    %v1509 = vadd.f32 %v1445, %v1477
    %v1510 = vadd.f32 %v1446, %v1478
    %v1511 = vadd.f32 %v1447, %v1479
    %v1512 = vadd.f32 %v1448, %v1480
    %v1513 = vadd.f32 %v1449, %v1481
    %v1514 = vadd.f32 %v1450, %v1482
    %v1515 = vadd.f32 %v1451, %v1483
    %v1516 = vadd.f32 %v1452, %v1484
    %v1517 = vadd.f32 %v1453, %v1485
    %v1518 = vadd.f32 %v1454, %v1486
    %v1519 = vadd.f32 %v1455, %v1487
    %v1520 = vadd.f32 %v1456, %v1488
    %v1521 = vadd.f32 %v1457, %v1489
    %v1522 = vadd.f32 %v1458, %v1490
    %1523 = vst [vmem:[#allocation5] sm:$0xff] %v1491
    %1524 = vst [vmem:[#allocation5 + $0x8] sm:$0xff] %v1492
    %1525 = vst [vmem:[#allocation5 + $0x10] sm:$0xff] %v1493
    %1526 = vst [vmem:[#allocation5 + $0x18] sm:$0xff] %v1494
    %1527 = vst [vmem:[#allocation5 + $0x20] sm:$0xff] %v1495
    %1528 = vst [vmem:[#allocation5 + $0x28] sm:$0xff] %v1496
    %1529 = vst [vmem:[#allocation5 + $0x30] sm:$0xff] %v1497
    %1530 = vst [vmem:[#allocation5 + $0x38] sm:$0xff] %v1498
    %1531 = vst [vmem:[#allocation5 + $0x40] sm:$0xff] %v1499
    %1532 = vst [vmem:[#allocation5 + $0x48] sm:$0xff] %v1500
    %1533 = vst [vmem:[#allocation5 + $0x50] sm:$0xff] %v1501
    %1534 = vst [vmem:[#allocation5 + $0x58] sm:$0xff] %v1502
    %1535 = vst [vmem:[#allocation5 + $0x60] sm:$0xff] %v1503
    %1536 = vst [vmem:[#allocation5 + $0x68] sm:$0xff] %v1504
    %1537 = vst [vmem:[#allocation5 + $0x70] sm:$0xff] %v1505
    %1538 = vst [vmem:[#allocation5 + $0x78] sm:$0xff] %v1506
    %1539 = vst [vmem:[#allocation5 + $0x80] sm:$0xff] %v1507
    %1540 = vst [vmem:[#allocation5 + $0x88] sm:$0xff] %v1508
    %1541 = vst [vmem:[#allocation5 + $0x90] sm:$0xff] %v1509
    %1542 = vst [vmem:[#allocation5 + $0x98] sm:$0xff] %v1510
    %1543 = vst [vmem:[#allocation5 + $0xa0] sm:$0xff] %v1511
    %1544 = vst [vmem:[#allocation5 + $0xa8] sm:$0xff] %v1512
    %1545 = vst [vmem:[#allocation5 + $0xb0] sm:$0xff] %v1513
    %1546 = vst [vmem:[#allocation5 + $0xb8] sm:$0xff] %v1514
    %1547 = vst [vmem:[#allocation5 + $0xc0] sm:$0xff] %v1515
    %1548 = vst [vmem:[#allocation5 + $0xc8] sm:$0xff] %v1516
    %1549 = vst [vmem:[#allocation5 + $0xd0] sm:$0xff] %v1517
    %1550 = vst [vmem:[#allocation5 + $0xd8] sm:$0xff] %v1518
    %1551 = vst [vmem:[#allocation5 + $0xe0] sm:$0xff] %v1519
    %1552 = vst [vmem:[#allocation5 + $0xe8] sm:$0xff] %v1520
    %1553 = vst [vmem:[#allocation5 + $0xf0] sm:$0xff] %v1521
    %1554 = vst [vmem:[#allocation5 + $0xf8] sm:$0xff] %v1522
    // Predicated region
    $region30: #{tpu_custom_call.1} parent=1 // pred_check
      _
    $region31: #{tpu_custom_call.1} parent=1 // pred_check_branch
      %1556 = sbr.rel (0) target = $region33
    $region32: #{tpu_custom_call.1} parent=1 // pred_region
      %s1558 = ssub.s32 4096, 4096
      %1559 = vsyncadd [#allocation4], %s1558
      %s1560 = sshll.u32 [#allocation5], 4
      %s1561 = int_to_ptr.vmem [resolvable:$true] %s1560
      %1566 = dma.vmem_to_hbm [thread:$0]  %s1561, 4096, %s6, [#allocation4], 128, 128, 8
    $region33: #{tpu_custom_call.1} parent=1 // pred_fallthru
      _
    // Predicated region
    $region34: #{tpu_custom_call.1} parent=1 // pred_check
      _
    $region35: #{tpu_custom_call.1} parent=1 // pred_check_branch
      %1568 = sbr.rel (0) target = $region37
    $region36: #{tpu_custom_call.1} parent=1 // pred_region
      %1569 = dma.done [#allocation4], 4096
    $region37: #{tpu_custom_call.1} parent=1 // pred_fallthru
      _
    %1570 = vsyncpa [#allocation3], 1
    %1571 = vsyncpa [#allocation4], 1

</llo_original>
